<compile_context>
chip_gen: v7x
topology: tpu7x:2x2x1
jax: 0.10.0
libtpu: 0.0.40
codegen_flags: <defaults>
</compile_context>

<pallas_src>
import functools

import jax
import jax.numpy as jnp
from jax import lax
from jax.experimental import pallas as pl
from jax.experimental.pallas import tpu as pltpu


# ----------------------------------------------------------------------------
# Small static helpers
# ----------------------------------------------------------------------------

def _round_up(x, m):
    return ((x + m - 1) // m) * m


@functools.lru_cache(maxsize=None)
def _vmem_limit_bytes():
    """Scoped-VMEM limit with headroom (48 MiB on v7x, <=100 MiB on v5e/v6e)."""
    try:
        cap = int(pltpu.get_tpu_info().vmem_capacity_bytes)
    except Exception:
        cap = 128 * 1024 * 1024
    return int(min(cap * 3 // 4, 100 * 1024 * 1024))


def _pick_vocab_tile(v, target=2048):
    """Largest multiple-of-128 divisor of v <= target, or None (fused path)."""
    if v <= target or v % 128 != 0:
        return None
    t = (target // 128) * 128
    for vt in range(t, 127, -128):
        if v % vt == 0:
            return vt
    return None


def _sigmoid(x):
    # One tanh EUP push instead of exp + reciprocal.
    return 0.5 * jnp.tanh(0.5 * x) + 0.5


# ----------------------------------------------------------------------------
# Pallas kernels
# ----------------------------------------------------------------------------

def _fc_kernel(x_ref, w_ref, b_ref, o_ref, *, compute_dtype):
    # y = x @ W + b   (weight pre-cast to compute_dtype; f32 accumulation)
    x = x_ref[...].astype(compute_dtype)
    y = jnp.dot(x, w_ref[...], preferred_element_type=jnp.float32) + b_ref[...]
    o_ref[...] = y.astype(o_ref.dtype)


def _fc_logsoftmax_kernel(x_ref, w_ref, b_ref, o_ref, *, compute_dtype):
    # Fused fc_out + log_softmax (small vocab path: full V held per block).
    x = x_ref[...].astype(compute_dtype)
    y = jnp.dot(x, w_ref[...], preferred_element_type=jnp.float32) + b_ref[...]
    m = jnp.max(y, axis=-1, keepdims=True)
    lse = m + jnp.log(jnp.sum(jnp.exp(y - m), axis=-1, keepdims=True))
    o_ref[...] = (y - lse).astype(o_ref.dtype)


def _fc_lse_kernel(x_ref, w_ref, b_ref, lse_ref, m_sc, s_sc, *, compute_dtype):
    # Pass 1 of V-tiled fc_out: running (max, sumexp) over vocab tiles.
    vi = pl.program_id(1)

    @pl.when(vi == 0)
    def _():
        m_sc[...] = jnp.full(m_sc.shape, -jnp.inf, m_sc.dtype)
        s_sc[...] = jnp.zeros(s_sc.shape, s_sc.dtype)

    x = x_ref[...].astype(compute_dtype)
    y = jnp.dot(x, w_ref[...], preferred_element_type=jnp.float32) + b_ref[...]
    m_new = jnp.maximum(m_sc[...], jnp.max(y, axis=-1, keepdims=True))
    s_sc[...] = (s_sc[...] * jnp.exp(m_sc[...] - m_new)
                 + jnp.sum(jnp.exp(y - m_new), axis=-1, keepdims=True))
    m_sc[...] = m_new

    @pl.when(vi == pl.num_programs(1) - 1)
    def _():
        lse_ref[...] = m_sc[...] + jnp.log(s_sc[...])


def _fc_sub_lse_kernel(x_ref, w_ref, b_ref, lse_ref, o_ref, *, compute_dtype):
    # Pass 2 of V-tiled fc_out: recompute logits for this vocab tile, subtract lse.
    x = x_ref[...].astype(compute_dtype)
    y = jnp.dot(x, w_ref[...], preferred_element_type=jnp.float32) + b_ref[...]
    o_ref[...] = (y - lse_ref[...]).astype(o_ref.dtype)


def _lstm_chunk_kernel(x_ref, wih_ref, whh_ref, b_ref, h0_ref, c0_ref,
                       out_ref, hN_ref, cN_ref, xg_ref,
                       *, hidden, tc, seq_len, mask_tail, compute_dtype, unroll):
    """Runs `tc` LSTM timesteps per grid step.  Grid = (batch_blocks, chunks).

    x_ref  : (tc, Bb, H)    layer input (compute_dtype)
    wih_ref: (H, 4H)        W_ih^T resident
    whh_ref: (H, 4H)        W_hh^T resident
    b_ref  : (1, 4H)        b_ih + b_hh (f32)
    h0/c0  : (Bb, H)        initial states for this batch block
    out_ref: (tc, Bb, H)    hidden outputs (compute_dtype)
    hN/cN  : (Bb, H)        resident state carriers == final states (f32)
    xg_ref : (tc, Bb, 4H)   f32 VMEM scratch for this chunk's input gates
    """
    chunk = pl.program_id(1)

    @pl.when(chunk == 0)
    def _():
        hN_ref[...] = h0_ref[...]
        cN_ref[...] = c0_ref[...]

    # Fused input-gate precompute for the whole chunk: one big MXU pass that
    # stays in VMEM (no xg HBM round trip).
    tcb, bb, _ = x_ref.shape
    x = x_ref[...].astype(compute_dtype).reshape(tcb * bb, hidden)
    xg = jnp.dot(x, wih_ref[...], preferred_element_type=jnp.float32) + b_ref[...]
    xg_ref[...] = xg.reshape(xg_ref.shape)

    whh = whh_ref[...]

    def step(j, carry):
        h, c = carry
        gates = xg_ref[j] + jnp.dot(h.astype(compute_dtype), whh,
                                    preferred_element_type=jnp.float32)
        # PyTorch gate order (i, f, g, o).  NOTE: H % 128 == 0 keeps these
        # slices lane-aligned; other H is still correct but slower.
        i = _sigmoid(gates[:, 0 * hidden:1 * hidden])
        f = _sigmoid(gates[:, 1 * hidden:2 * hidden])
        g = jnp.tanh(gates[:, 2 * hidden:3 * hidden])
        o = _sigmoid(gates[:, 3 * hidden:4 * hidden])
        c_new = f * c + i * g
        h_new = o * jnp.tanh(c_new)
        out_ref[j] = h_new.astype(out_ref.dtype)
        if mask_tail:  # static Python bool: only emitted when T was padded
            valid = (chunk * tc + j) < seq_len
            h_new = jnp.where(valid, h_new, h)
            c_new = jnp.where(valid, c_new, c)
        return (h_new, c_new)

    h_fin, c_fin = lax.fori_loop(0, tc, step, (hN_ref[...], cN_ref[...]),
                                 unroll=unroll)
    hN_ref[...] = h_fin
    cN_ref[...] = c_fin


# ----------------------------------------------------------------------------
# pallas_call wrappers
# ----------------------------------------------------------------------------

def _run_fc(x2d, w_t, b, *, kernel, out_dtype, rt, vmem_limit, compute_dtype):
    """x2d: (N, D_in); w_t: (D_in, D_out) in compute_dtype; b: (1, D_out) f32."""
    n, d_in = x2d.shape
    d_out = w_t.shape[1]
    kern = functools.partial(kernel, compute_dtype=compute_dtype)
    return pl.pallas_call(
        kern,
        out_shape=jax.ShapeDtypeStruct((n, d_out), out_dtype),
        grid_spec=pltpu.PrefetchScalarGridSpec(
            num_scalar_prefetch=0,
            grid=(n // rt,),
            in_specs=[
                pl.BlockSpec((rt, d_in), lambda i: (i, 0)),
                pl.BlockSpec((d_in, d_out), lambda i: (0, 0)),   # resident weight
                pl.BlockSpec((1, d_out), lambda i: (0, 0)),      # resident bias
            ],
            out_specs=pl.BlockSpec((rt, d_out), lambda i: (i, 0)),
        ),
        compiler_params=pltpu.CompilerParams(
            dimension_semantics=("parallel",),
            vmem_limit_bytes=vmem_limit),
    )(x2d, w_t, b)


def _run_fc_out_tiled(x2d, w_t, b, *, rt, vt, vmem_limit, compute_dtype):
    """Two-pass V-tiled fc_out + log_softmax (large vocab)."""
    n, h = x2d.shape
    v = w_t.shape[1]
    n_r, n_v = n // rt, v // vt

    lse = pl.pallas_call(
        functools.partial(_fc_lse_kernel, compute_dtype=compute_dtype),
        out_shape=jax.ShapeDtypeStruct((n, 1), jnp.float32),
        grid_spec=pltpu.PrefetchScalarGridSpec(
            num_scalar_prefetch=0,
            grid=(n_r, n_v),
            in_specs=[
                pl.BlockSpec((rt, h), lambda i, j: (i, 0)),
                pl.BlockSpec((h, vt), lambda i, j: (0, j)),
                pl.BlockSpec((1, vt), lambda i, j: (0, j)),
            ],
            out_specs=pl.BlockSpec((rt, 1), lambda i, j: (i, 0)),   # resident acc
            scratch_shapes=[pltpu.VMEM((rt, 1), jnp.float32),
                            pltpu.VMEM((rt, 1), jnp.float32)],
        ),
        compiler_params=pltpu.CompilerParams(
            dimension_semantics=("parallel", "arbitrary"),
            vmem_limit_bytes=vmem_limit),
    )(x2d, w_t, b)

    logp = pl.pallas_call(
        functools.partial(_fc_sub_lse_kernel, compute_dtype=compute_dtype),
        out_shape=jax.ShapeDtypeStruct((n, v), jnp.float32),
        grid_spec=pltpu.PrefetchScalarGridSpec(
            num_scalar_prefetch=0,
            grid=(n_r, n_v),
            in_specs=[
                pl.BlockSpec((rt, h), lambda i, j: (i, 0)),
                pl.BlockSpec((h, vt), lambda i, j: (0, j)),
                pl.BlockSpec((1, vt), lambda i, j: (0, j)),
                pl.BlockSpec((rt, 1), lambda i, j: (i, 0)),
            ],
            out_specs=pl.BlockSpec((rt, vt), lambda i, j: (i, j)),
        ),
        compiler_params=pltpu.CompilerParams(
            dimension_semantics=("parallel", "parallel"),
            vmem_limit_bytes=vmem_limit),
    )(x2d, w_t, b, lse)
    return logp


def _run_lstm_layer(x_tbd, w_ih_t, w_hh_t, b_gate, h0, c0, *,
                    hidden, tc, seq_len, batch_blocks, vmem_limit,
                    compute_dtype, act_dtype):
    """x_tbd: (Tp, Bp, H) time-major layer input (act_dtype)."""
    Tp, Bp, _ = x_tbd.shape
    bb = Bp // batch_blocks
    n_chunks = Tp // tc
    mask_tail = (Tp != seq_len)
    unroll = next(u for u in (8, 4, 2, 1) if tc % u == 0)   # partial unroll
    kern = functools.partial(
        _lstm_chunk_kernel, hidden=hidden, tc=tc, seq_len=seq_len,
        mask_tail=mask_tail, compute_dtype=compute_dtype, unroll=unroll)
    out, h_n, c_n = pl.pallas_call(
        kern,
        out_shape=(
            jax.ShapeDtypeStruct((Tp, Bp, hidden), act_dtype),
            jax.ShapeDtypeStruct((Bp, hidden), jnp.float32),
            jax.ShapeDtypeStruct((Bp, hidden), jnp.float32),
        ),
        grid_spec=pltpu.PrefetchScalarGridSpec(
            num_scalar_prefetch=0,
            grid=(batch_blocks, n_chunks),
            in_specs=[
                pl.BlockSpec((tc, bb, hidden), lambda b, t: (t, b, 0)),
                pl.BlockSpec((hidden, 4 * hidden), lambda b, t: (0, 0)),  # W_ih^T
                pl.BlockSpec((hidden, 4 * hidden), lambda b, t: (0, 0)),  # W_hh^T
                pl.BlockSpec((1, 4 * hidden), lambda b, t: (0, 0)),       # bias
                pl.BlockSpec((bb, hidden), lambda b, t: (b, 0)),          # h0
                pl.BlockSpec((bb, hidden), lambda b, t: (b, 0)),          # c0
            ],
            out_specs=(
                pl.BlockSpec((tc, bb, hidden), lambda b, t: (t, b, 0)),
                pl.BlockSpec((bb, hidden), lambda b, t: (b, 0)),   # resident state
                pl.BlockSpec((bb, hidden), lambda b, t: (b, 0)),   # resident state
            ),
            scratch_shapes=[pltpu.VMEM((tc, bb, 4 * hidden), jnp.float32)],
        ),
        compiler_params=pltpu.CompilerParams(
            # batch axis parallel (megacore split on v7x); time is sequential
            dimension_semantics=("parallel", "arbitrary"),
            vmem_limit_bytes=vmem_limit),
    )(x_tbd, w_ih_t, w_hh_t, b_gate, h0, c0)
    return out, h_n, c_n


# ----------------------------------------------------------------------------
# Forward pass
# ----------------------------------------------------------------------------

def lstm_forward(feature, h, c, params, *,
                 compute_dtype=jnp.bfloat16, time_chunk=32,
                 batch_blocks=1, vocab_tile=None):
    """feature: (B, T, input_dim); h, c: (num_layers, B, hidden).

    `params` must come from prepare_params (weights pre-cast to compute_dtype).
    `batch_blocks=2` splits the recurrence over batch halves (use on v7x).
    """
    B, T, _ = feature.shape
    H = params["w_in_t"].shape[1]          # static (from array shape)
    V = params["w_out_t"].shape[1]
    num_layers = len(params["w_ih_t"])     # static (list length)
    cd = compute_dtype
    act_dtype = cd                          # bf16 inter-layer activations
    vmem_limit = _vmem_limit_bytes()

    # --- pad batch once to a sublane multiple (per batch block) --------------
    batch_blocks = max(1, int(batch_blocks))
    align = 8 * batch_blocks
    Bp = _round_up(max(B, align), align)

    # --- time chunk: multiple of 8, shrunk to fit the VMEM budget ------------
    tc = min(_round_up(time_chunk, 8), _round_up(T, 8))
    act_bytes = jnp.dtype(act_dtype).itemsize
    w_bytes = jnp.dtype(cd).itemsize

    def _rec_chunk_bytes(tc_):
        return (tc_ * Bp * 4 * H * 4              # xg scratch (f32)
                + 4 * tc_ * Bp * H * act_bytes    # x + out blocks, double-buffered
                + 8 * H * H * w_bytes             # resident W_ih^T + W_hh^T
                + 6 * Bp * H * 4)                 # h0/c0 blocks + hN/cN residents
    while tc > 8 and _rec_chunk_bytes(tc) > int(vmem_limit * 0.8):
        tc = max(8, tc // 2)
    Tp = _round_up(T, tc)
    rt = tc * Bp                                  # row tile: always divides rows

    # --- go time-major exactly once, pad time tail (masked in the kernel) ----
    x = jnp.transpose(feature, (1, 0, 2))                       # (T, B, D_in)
    x = jnp.pad(x, ((0, Tp - T), (0, Bp - B), (0, 0)))
    hp = jnp.pad(h, ((0, 0), (0, Bp - B), (0, 0)))
    cp = jnp.pad(c, ((0, 0), (0, Bp - B), (0, 0)))

    rows = Tp * Bp
    x2d = x.reshape(rows, x.shape[-1])

    # fc_in (row-tiled, bf16 activations out)
    x2d = _run_fc(x2d, params["w_in_t"], params["b_in"],
                  kernel=_fc_kernel, out_dtype=act_dtype, rt=rt,
                  vmem_limit=vmem_limit, compute_dtype=cd)

    h_fin, c_fin = [], []
    for layer in range(num_layers):
        x_tbd = x2d.reshape(Tp, Bp, H)
        out_tbd, h_n, c_n = _run_lstm_layer(
            x_tbd, params["w_ih_t"][layer], params["w_hh_t"][layer],
            params["b_gates"][layer], hp[layer], cp[layer],
            hidden=H, tc=tc, seq_len=T, batch_blocks=batch_blocks,
            vmem_limit=vmem_limit, compute_dtype=cd, act_dtype=act_dtype)
        x2d = out_tbd.reshape(rows, H)            # stays time-major
        h_fin.append(h_n)
        c_fin.append(c_n)
    # TODO(synk): inter-layer dropout (training mode) not implemented.

    # fc_out + LogSoftmax(dim=2): V-tiled two-pass for large vocab, fused else.
    if vocab_tile is not None and V % vocab_tile == 0 and V > vocab_tile:
        vt = vocab_tile
    else:
        vt = _pick_vocab_tile(V)
    if vt is not None:
        logp2d = _run_fc_out_tiled(x2d, params["w_out_t"], params["b_out"],
                                   rt=rt, vt=vt, vmem_limit=vmem_limit,
                                   compute_dtype=cd)
    else:
        logp2d = _run_fc(x2d, params["w_out_t"], params["b_out"],
                         kernel=_fc_logsoftmax_kernel, out_dtype=jnp.float32,
                         rt=rt, vmem_limit=vmem_limit, compute_dtype=cd)

    logp = logp2d.reshape(Tp, Bp, V)[:T, :B].transpose(1, 0, 2)   # (B, T, V)
    h_next = jnp.stack(h_fin, axis=0)[:, :B]
    c_next = jnp.stack(c_fin, axis=0)[:, :B]
    return logp, h_next, c_next


# ----------------------------------------------------------------------------
# Parameters: raw f32 init (matches nn.Linear / nn.LSTM shapes) + kernel prep
# ----------------------------------------------------------------------------

def init_params(key, input_dim, hidden, vocab, num_layers):
    k = 1.0 / jnp.sqrt(hidden)
    keys = jax.random.split(key, 4 + 4 * num_layers)
    w_in = jax.random.uniform(keys[0], (hidden, input_dim), jnp.float32, -k, k)
    b_in = jax.random.uniform(keys[1], (hidden,), jnp.float32, -k, k)
    w_out = jax.random.uniform(keys[2], (vocab, hidden), jnp.float32, -k, k)
    b_out = jax.random.uniform(keys[3], (vocab,), jnp.float32, -k, k)

    w_ih_t, w_hh_t, b_gates = [], [], []
    for l in range(num_layers):
        kk = keys[4 + 4 * l: 8 + 4 * l]
        w_ih = jax.random.uniform(kk[0], (4 * hidden, hidden), jnp.float32, -k, k)
        w_hh = jax.random.uniform(kk[1], (4 * hidden, hidden), jnp.float32, -k, k)
        b_ih = jax.random.uniform(kk[2], (4 * hidden,), jnp.float32, -k, k)
        b_hh = jax.random.uniform(kk[3], (4 * hidden,), jnp.float32, -k, k)
        w_ih_t.append(w_ih.T)                  # (H, 4H)
        w_hh_t.append(w_hh.T)                  # (H, 4H)
        b_gates.append(b_ih + b_hh)            # (4H,)

    return dict(w_in_t=w_in.T, b_in=b_in, w_out_t=w_out.T, b_out=b_out,
                w_ih_t=w_ih_t, w_hh_t=w_hh_t, b_gates=b_gates)


def prepare_params(raw, compute_dtype):
    """Pre-cast weights to the MXU compute dtype ONCE; biases stay f32 (1, D)."""
    cd = compute_dtype
    H = raw["w_in_t"].shape[1]
    V = raw["w_out_t"].shape[1]
    return dict(
        w_in_t=raw["w_in_t"].astype(cd),
        b_in=raw["b_in"].reshape(1, H),
        w_out_t=raw["w_out_t"].astype(cd),
        b_out=raw["b_out"].reshape(1, V),
        w_ih_t=[w.astype(cd) for w in raw["w_ih_t"]],
        w_hh_t=[w.astype(cd) for w in raw["w_hh_t"]],
        b_gates=[b.reshape(1, 4 * H) for b in raw["b_gates"]],
    )


# ----------------------------------------------------------------------------
# Pure-JAX f32 reference (same math) for correctness checks
# ----------------------------------------------------------------------------

def reference_forward(feature, h, c, params):
    with jax.default_matmul_precision("highest"):
        B, T, _ = feature.shape
        H = params["w_in_t"].shape[1]
        num_layers = len(params["w_ih_t"])
        x = feature @ params["w_in_t"] + params["b_in"]
        h_fin, c_fin = [], []
        for l in range(num_layers):
            hs, cs = h[l], c[l]
            outs = []
            for t in range(T):
                g = x[:, t] @ params["w_ih_t"][l] + params["b_gates"][l] \
                    + hs @ params["w_hh_t"][l]
                i = jax.nn.sigmoid(g[:, 0 * H:1 * H])
                f = jax.nn.sigmoid(g[:, 1 * H:2 * H])
                gg = jnp.tanh(g[:, 2 * H:3 * H])
                o = jax.nn.sigmoid(g[:, 3 * H:4 * H])
                cs = f * cs + i * gg
                hs = o * jnp.tanh(cs)
                outs.append(hs)
            x = jnp.stack(outs, axis=1)
            h_fin.append(hs)
            c_fin.append(cs)
        y = x @ params["w_out_t"] + params["b_out"]
        y = jax.nn.log_softmax(y, axis=2)
        return y, jnp.stack(h_fin), jnp.stack(c_fin)


if __name__ == "__main__":
    root = jax.random.PRNGKey(0)

    def make_inputs(key, B, T, D, H, L):
        k1, k2, k3, kp = jax.random.split(key, 4)
        feature = jax.random.normal(k1, (B, T, D), jnp.float32)
        h0 = jax.random.normal(k2, (L, B, H), jnp.float32)
        c0 = jax.random.normal(k3, (L, B, H), jnp.float32)
        return feature, h0, c0, kp

    # ---- Case 1: small shapes, fused fc_out, single batch block -------------
    B, T, D, H, V, L = 2, 8, 16, 32, 48, 2
    feature, h0, c0, kp = make_inputs(root, B, T, D, H, L)
    raw = init_params(kp, D, H, V, L)
    ref_out, ref_h, ref_c = reference_forward(feature, h0, c0, raw)

    p_bf16 = prepare_params(raw, jnp.bfloat16)
    fwd_bf16 = jax.jit(functools.partial(lstm_forward, compute_dtype=jnp.bfloat16))
    out, h_n, c_n = fwd_bf16(feature, h0, c0, p_bf16)
    jax.block_until_ready((out, h_n, c_n))
    assert out.shape == (B, T, V)
    assert h_n.shape == (L, B, H) and c_n.shape == (L, B, H)
    assert jnp.allclose(out, ref_out, atol=5e-2, rtol=5e-2)
    assert jnp.allclose(h_n, ref_h, atol=5e-2, rtol=5e-2)
    assert jnp.allclose(c_n, ref_c, atol=5e-2, rtol=5e-2)

    p_f32 = prepare_params(raw, jnp.float32)
    fwd_f32 = jax.jit(functools.partial(lstm_forward, compute_dtype=jnp.float32))
    out32, h32, c32 = fwd_f32(feature, h0, c0, p_f32)
    jax.block_until_ready((out32, h32, c32))
    assert jnp.allclose(out32, ref_out, atol=1e-2, rtol=1e-2)
    assert jnp.allclose(h32, ref_h, atol=1e-2, rtol=1e-2)
    assert jnp.allclose(c32, ref_c, atol=1e-2, rtol=1e-2)

    # ---- Case 2: masked time tail, 2 batch blocks, V-tiled fc_out ------------
    B2, T2, D2, H2, V2, L2 = 16, 10, 16, 32, 512, 2
    feature2, h02, c02, kp2 = make_inputs(jax.random.fold_in(root, 1),
                                          B2, T2, D2, H2, L2)
    raw2 = init_params(kp2, D2, H2, V2, L2)
    ref2_out, ref2_h, ref2_c = reference_forward(feature2, h02, c02, raw2)
    p2 = prepare_params(raw2, jnp.bfloat16)
    fwd2 = jax.jit(functools.partial(lstm_forward, compute_dtype=jnp.bfloat16,
                                     time_chunk=8, batch_blocks=2,
                                     vocab_tile=256))
    out2, hn2, cn2 = fwd2(feature2, h02, c02, p2)
    jax.block_until_ready((out2, hn2, cn2))
    assert out2.shape == (B2, T2, V2)
    assert jnp.allclose(out2, ref2_out, atol=5e-2, rtol=5e-2)
    assert jnp.allclose(hn2, ref2_h, atol=5e-2, rtol=5e-2)
    assert jnp.allclose(cn2, ref2_c, atol=5e-2, rtol=5e-2)

    print("KERNEL_OK")
</pallas_src>

<mosaic_0001>
module attributes {stable_mosaic.version = 11 : i64} {
  func.func @_fc_kernel(%arg0: i32, %arg1: memref<64x16xf32, #tpu.memory_space<vmem>>, %arg2: memref<16x32xbf16, #tpu.memory_space<vmem>>, %arg3: memref<1x32xf32, #tpu.memory_space<vmem>>, %arg4: memref<64x32xbf16, #tpu.memory_space<vmem>>) attributes {dimension_semantics = [#tpu.dimension_semantics<parallel>], iteration_bounds = array<i64: 1>, scalar_prefetch = 0 : i64, scratch_operands = 0 : i64, tpu.core_type = #tpu.core_type<tc>, window_params = [{transform_indices = @transform_0, window_bounds = array<i64: 64, 16>}, {pipeline_mode = #tpu.pipeline_mode<synchronous>, transform_indices = @transform_1, window_bounds = array<i64: 16, 32>}, {pipeline_mode = #tpu.pipeline_mode<synchronous>, transform_indices = @transform_2, window_bounds = array<i64: 1, 32>}, {transform_indices = @transform_3, window_bounds = array<i64: 64, 32>}]} {
    %c0 = arith.constant 0 : index
    %c0_0 = arith.constant 0 : index
    %0 = vector.load %arg1[%c0, %c0_0] : memref<64x16xf32, #tpu.memory_space<vmem>>, vector<64x16xf32>
    %1 = arith.truncf %0 : vector<64x16xf32> to vector<64x16xbf16>
    %c0_1 = arith.constant 0 : index
    %c0_2 = arith.constant 0 : index
    %2 = vector.load %arg2[%c0_1, %c0_2] : memref<16x32xbf16, #tpu.memory_space<vmem>>, vector<16x32xbf16>
    %cst = arith.constant dense<0.000000e+00> : vector<64x32xf32>
    %3 = tpu.matmul %1, %2, %cst {dimension_numbers = #tpu.dot_dimension_numbers<[1], [0], [0], [1], [0, 0, 1, 1], [], []>} : vector<64x16xbf16>, vector<16x32xbf16>, vector<64x32xf32> -> vector<64x32xf32>
    %c0_3 = arith.constant 0 : index
    %c0_4 = arith.constant 0 : index
    %4 = vector.load %arg3[%c0_3, %c0_4] : memref<1x32xf32, #tpu.memory_space<vmem>>, vector<1x32xf32>
    %5 = vector.broadcast %4 : vector<1x32xf32> to vector<64x32xf32>
    %6 = arith.addf %3, %5 : vector<64x32xf32>
    %7 = arith.truncf %6 : vector<64x32xf32> to vector<64x32xbf16>
    %c0_5 = arith.constant 0 : index
    %c0_6 = arith.constant 0 : index
    %8 = vector.load %arg4[%c0_5, %c0_6] : memref<64x32xbf16, #tpu.memory_space<vmem>>, vector<64x32xbf16>
    tpu.vector_store %arg4[%c0_5, %c0_6], %7 {strides = array<i32>} : memref<64x32xbf16, #tpu.memory_space<vmem>>, vector<64x32xbf16>,
    return
  }
  func.func @transform_0(%arg0: i32) -> (i32, i32) {
    %c0_i32 = arith.constant 0 : i32
    %c0_i32_0 = arith.constant 0 : i32
    return %arg0, %c0_i32 : i32, i32
  }
  func.func @transform_1(%arg0: i32) -> (i32, i32) {
    %c0_i32 = arith.constant 0 : i32
    %c0_i32_0 = arith.constant 0 : i32
    %c0_i32_1 = arith.constant 0 : i32
    return %c0_i32, %c0_i32_0 : i32, i32
  }
  func.func @transform_2(%arg0: i32) -> (i32, i32) {
    %c0_i32 = arith.constant 0 : i32
    %c0_i32_0 = arith.constant 0 : i32
    %c0_i32_1 = arith.constant 0 : i32
    return %c0_i32, %c0_i32_0 : i32, i32
  }
  func.func @transform_3(%arg0: i32) -> (i32, i32) {
    %c0_i32 = arith.constant 0 : i32
    %c0_i32_0 = arith.constant 0 : i32
    return %arg0, %c0_i32 : i32, i32
  }
}

module attributes {stable_mosaic.version = 11 : i64} {
  func.func @_fc_logsoftmax_kernel(%arg0: i32, %arg1: memref<64x32xbf16, #tpu.memory_space<vmem>>, %arg2: memref<32x48xbf16, #tpu.memory_space<vmem>>, %arg3: memref<1x48xf32, #tpu.memory_space<vmem>>, %arg4: memref<64x48xf32, #tpu.memory_space<vmem>>) attributes {dimension_semantics = [#tpu.dimension_semantics<parallel>], iteration_bounds = array<i64: 1>, scalar_prefetch = 0 : i64, scratch_operands = 0 : i64, tpu.core_type = #tpu.core_type<tc>, window_params = [{transform_indices = @transform_0, window_bounds = array<i64: 64, 32>}, {pipeline_mode = #tpu.pipeline_mode<synchronous>, transform_indices = @transform_1, window_bounds = array<i64: 32, 48>}, {pipeline_mode = #tpu.pipeline_mode<synchronous>, transform_indices = @transform_2, window_bounds = array<i64: 1, 48>}, {transform_indices = @transform_3, window_bounds = array<i64: 64, 48>}]} {
    %c0 = arith.constant 0 : index
    %c0_0 = arith.constant 0 : index
    %0 = vector.load %arg1[%c0, %c0_0] : memref<64x32xbf16, #tpu.memory_space<vmem>>, vector<64x32xbf16>
    %c0_1 = arith.constant 0 : index
    %c0_2 = arith.constant 0 : index
    %1 = vector.load %arg2[%c0_1, %c0_2] : memref<32x48xbf16, #tpu.memory_space<vmem>>, vector<32x48xbf16>
    %cst = arith.constant dense<0.000000e+00> : vector<64x48xf32>
    %2 = tpu.matmul %0, %1, %cst {dimension_numbers = #tpu.dot_dimension_numbers<[1], [0], [0], [1], [0, 0, 1, 1], [], []>} : vector<64x32xbf16>, vector<32x48xbf16>, vector<64x48xf32> -> vector<64x48xf32>
    %c0_3 = arith.constant 0 : index
    %c0_4 = arith.constant 0 : index
    %3 = vector.load %arg3[%c0_3, %c0_4] : memref<1x48xf32, #tpu.memory_space<vmem>>, vector<1x48xf32>
    %4 = vector.broadcast %3 : vector<1x48xf32> to vector<64x48xf32>
    %5 = arith.addf %2, %4 : vector<64x48xf32>
    %cst_5 = arith.constant dense<0xFF800000> : vector<64xf32>
    %6 = vector.multi_reduction <maximumf>, %5, %cst_5 [1] : vector<64x48xf32> to vector<64xf32>
    %7 = vector.shape_cast %6 : vector<64xf32> to vector<64x1xf32>
    %8 = vector.broadcast %7 : vector<64x1xf32> to vector<64x48xf32>
    %9 = arith.subf %5, %8 : vector<64x48xf32>
    %10 = math.exp %9 : vector<64x48xf32>
    %cst_6 = arith.constant dense<0.000000e+00> : vector<64xf32>
    %11 = vector.multi_reduction <add>, %10, %cst_6 [1] : vector<64x48xf32> to vector<64xf32>
    %12 = vector.shape_cast %11 : vector<64xf32> to vector<64x1xf32>
    %13 = math.log %12 : vector<64x1xf32>
    %14 = arith.addf %7, %13 : vector<64x1xf32>
    %15 = vector.broadcast %14 : vector<64x1xf32> to vector<64x48xf32>
    %16 = arith.subf %5, %15 : vector<64x48xf32>
    %c0_7 = arith.constant 0 : index
    %c0_8 = arith.constant 0 : index
    %17 = vector.load %arg4[%c0_7, %c0_8] : memref<64x48xf32, #tpu.memory_space<vmem>>, vector<64x48xf32>
    tpu.vector_store %arg4[%c0_7, %c0_8], %16 {strides = array<i32>} : memref<64x48xf32, #tpu.memory_space<vmem>>, vector<64x48xf32>,
    return
  }
  func.func @transform_0(%arg0: i32) -> (i32, i32) {
    %c0_i32 = arith.constant 0 : i32
    %c0_i32_0 = arith.constant 0 : i32
    return %arg0, %c0_i32 : i32, i32
  }
  func.func @transform_1(%arg0: i32) -> (i32, i32) {
    %c0_i32 = arith.constant 0 : i32
    %c0_i32_0 = arith.constant 0 : i32
    %c0_i32_1 = arith.constant 0 : i32
    return %c0_i32, %c0_i32_0 : i32, i32
  }
  func.func @transform_2(%arg0: i32) -> (i32, i32) {
    %c0_i32 = arith.constant 0 : i32
    %c0_i32_0 = arith.constant 0 : i32
    %c0_i32_1 = arith.constant 0 : i32
    return %c0_i32, %c0_i32_0 : i32, i32
  }
  func.func @transform_3(%arg0: i32) -> (i32, i32) {
    %c0_i32 = arith.constant 0 : i32
    %c0_i32_0 = arith.constant 0 : i32
    return %arg0, %c0_i32 : i32, i32
  }
}

module attributes {stable_mosaic.version = 11 : i64} {
  func.func @_lstm_chunk_kernel(%arg0: i32, %arg1: i32, %arg2: memref<8x8x32xbf16, #tpu.memory_space<vmem>>, %arg3: memref<32x128xbf16, #tpu.memory_space<vmem>>, %arg4: memref<32x128xbf16, #tpu.memory_space<vmem>>, %arg5: memref<1x128xf32, #tpu.memory_space<vmem>>, %arg6: memref<8x32xf32, #tpu.memory_space<vmem>>, %arg7: memref<8x32xf32, #tpu.memory_space<vmem>>, %arg8: memref<8x8x32xbf16, #tpu.memory_space<vmem>>, %arg9: memref<8x32xf32, #tpu.memory_space<vmem>>, %arg10: memref<8x32xf32, #tpu.memory_space<vmem>>, %arg11: memref<8x8x128xf32, #tpu.memory_space<vmem>>) attributes {dimension_semantics = [#tpu.dimension_semantics<parallel>, #tpu.dimension_semantics<arbitrary>], iteration_bounds = array<i64: 1, 1>, scalar_prefetch = 0 : i64, scratch_operands = 1 : i64, tpu.core_type = #tpu.core_type<tc>, window_params = [{transform_indices = @transform_0, window_bounds = array<i64: 8, 8, 32>}, {pipeline_mode = #tpu.pipeline_mode<synchronous>, transform_indices = @transform_1, window_bounds = array<i64: 32, 128>}, {pipeline_mode = #tpu.pipeline_mode<synchronous>, transform_indices = @transform_2, window_bounds = array<i64: 32, 128>}, {pipeline_mode = #tpu.pipeline_mode<synchronous>, transform_indices = @transform_3, window_bounds = array<i64: 1, 128>}, {transform_indices = @transform_4, window_bounds = array<i64: 8, 32>}, {transform_indices = @transform_5, window_bounds = array<i64: 8, 32>}, {transform_indices = @transform_6, window_bounds = array<i64: 8, 8, 32>}, {transform_indices = @transform_7, window_bounds = array<i64: 8, 32>}, {transform_indices = @transform_8, window_bounds = array<i64: 8, 32>}]} {
    %c0_i32 = arith.constant 0 : i32
    %0 = arith.cmpi eq, %arg1, %c0_i32 : i32
    %1 = arith.extui %0 : i1 to i32
    %c0_i32_0 = arith.constant 0 : i32
    %2 = arith.cmpi ne, %1, %c0_i32_0 : i32
    scf.if %2 {
      %c0_133 = arith.constant 0 : index
      %c0_134 = arith.constant 0 : index
      %353 = vector.load %arg6[%c0_133, %c0_134] : memref<8x32xf32, #tpu.memory_space<vmem>>, vector<8x32xf32>
      %c0_135 = arith.constant 0 : index
      %c0_136 = arith.constant 0 : index
      %354 = vector.load %arg9[%c0_135, %c0_136] : memref<8x32xf32, #tpu.memory_space<vmem>>, vector<8x32xf32>
      tpu.vector_store %arg9[%c0_135, %c0_136], %353 {strides = array<i32>} : memref<8x32xf32, #tpu.memory_space<vmem>>, vector<8x32xf32>,
      %c0_137 = arith.constant 0 : index
      %c0_138 = arith.constant 0 : index
      %355 = vector.load %arg7[%c0_137, %c0_138] : memref<8x32xf32, #tpu.memory_space<vmem>>, vector<8x32xf32>
      %c0_139 = arith.constant 0 : index
      %c0_140 = arith.constant 0 : index
      %356 = vector.load %arg10[%c0_139, %c0_140] : memref<8x32xf32, #tpu.memory_space<vmem>>, vector<8x32xf32>
      tpu.vector_store %arg10[%c0_139, %c0_140], %355 {strides = array<i32>} : memref<8x32xf32, #tpu.memory_space<vmem>>, vector<8x32xf32>,
    } else {
    }
    %c0 = arith.constant 0 : index
    %c0_1 = arith.constant 0 : index
    %c0_2 = arith.constant 0 : index
    %3 = vector.load %arg2[%c0, %c0_1, %c0_2] : memref<8x8x32xbf16, #tpu.memory_space<vmem>>, vector<8x8x32xbf16>
    %4 = vector.shape_cast %3 : vector<8x8x32xbf16> to vector<64x32xbf16>
    %c0_3 = arith.constant 0 : index
    %c0_4 = arith.constant 0 : index
    %5 = vector.load %arg3[%c0_3, %c0_4] : memref<32x128xbf16, #tpu.memory_space<vmem>>, vector<32x128xbf16>
    %cst = arith.constant dense<0.000000e+00> : vector<64x128xf32>
    %6 = tpu.matmul %4, %5, %cst {dimension_numbers = #tpu.dot_dimension_numbers<[1], [0], [0], [1], [0, 0, 1, 1], [], []>} : vector<64x32xbf16>, vector<32x128xbf16>, vector<64x128xf32> -> vector<64x128xf32>
    %c0_5 = arith.constant 0 : index
    %c0_6 = arith.constant 0 : index
    %7 = vector.load %arg5[%c0_5, %c0_6] : memref<1x128xf32, #tpu.memory_space<vmem>>, vector<1x128xf32>
    %8 = vector.broadcast %7 : vector<1x128xf32> to vector<64x128xf32>
    %9 = arith.addf %6, %8 : vector<64x128xf32>
    %10 = vector.shape_cast %9 : vector<64x128xf32> to vector<8x8x128xf32>
    %c0_7 = arith.constant 0 : index
    %c0_8 = arith.constant 0 : index
    %c0_9 = arith.constant 0 : index
    %11 = vector.load %arg11[%c0_7, %c0_8, %c0_9] : memref<8x8x128xf32, #tpu.memory_space<vmem>>, vector<8x8x128xf32>
    tpu.vector_store %arg11[%c0_7, %c0_8, %c0_9], %10 {strides = array<i32>} : memref<8x8x128xf32, #tpu.memory_space<vmem>>, vector<8x8x128xf32>,
    %c0_10 = arith.constant 0 : index
    %c0_11 = arith.constant 0 : index
    %12 = vector.load %arg4[%c0_10, %c0_11] : memref<32x128xbf16, #tpu.memory_space<vmem>>, vector<32x128xbf16>
    %c0_12 = arith.constant 0 : index
    %c0_13 = arith.constant 0 : index
    %13 = vector.load %arg9[%c0_12, %c0_13] : memref<8x32xf32, #tpu.memory_space<vmem>>, vector<8x32xf32>
    %c0_14 = arith.constant 0 : index
    %c0_15 = arith.constant 0 : index
    %14 = vector.load %arg10[%c0_14, %c0_15] : memref<8x32xf32, #tpu.memory_space<vmem>>, vector<8x32xf32>
    %c0_i32_16 = arith.constant 0 : i32
    %15 = arith.index_cast %c0_i32_16 : i32 to index
    %c0_17 = arith.constant 0 : index
    %c0_18 = arith.constant 0 : index
    %16 = vector.load %arg11[%15, %c0_17, %c0_18] : memref<8x8x128xf32, #tpu.memory_space<vmem>>, vector<1x8x128xf32>
    %17 = vector.shape_cast %16 : vector<1x8x128xf32> to vector<8x128xf32>
    %18 = arith.truncf %13 : vector<8x32xf32> to vector<8x32xbf16>
    %cst_19 = arith.constant dense<0.000000e+00> : vector<8x128xf32>
    %19 = tpu.matmul %18, %12, %cst_19 {dimension_numbers = #tpu.dot_dimension_numbers<[1], [0], [0], [1], [0, 0, 1, 1], [], []>} : vector<8x32xbf16>, vector<32x128xbf16>, vector<8x128xf32> -> vector<8x128xf32>
    %20 = arith.addf %17, %19 : vector<8x128xf32>
    %21 = vector.extract_strided_slice %20 {offsets = [0, 0], sizes = [8, 32], strides = [1, 1]} : vector<8x128xf32> to vector<8x32xf32>
    %cst_20 = arith.constant 5.000000e-01 : f32
    %22 = vector.broadcast %cst_20 : f32 to vector<8x32xf32>
    %23 = arith.mulf %22, %21 : vector<8x32xf32>
    %24 = math.tanh %23 : vector<8x32xf32>
    %cst_21 = arith.constant 5.000000e-01 : f32
    %25 = vector.broadcast %cst_21 : f32 to vector<8x32xf32>
    %26 = arith.mulf %25, %24 : vector<8x32xf32>
    %cst_22 = arith.constant 5.000000e-01 : f32
    %27 = vector.broadcast %cst_22 : f32 to vector<8x32xf32>
    %28 = arith.addf %26, %27 : vector<8x32xf32>
    %29 = vector.extract_strided_slice %20 {offsets = [0, 32], sizes = [8, 32], strides = [1, 1]} : vector<8x128xf32> to vector<8x32xf32>
    %cst_23 = arith.constant 5.000000e-01 : f32
    %30 = vector.broadcast %cst_23 : f32 to vector<8x32xf32>
    %31 = arith.mulf %30, %29 : vector<8x32xf32>
    %32 = math.tanh %31 : vector<8x32xf32>
    %cst_24 = arith.constant 5.000000e-01 : f32
    %33 = vector.broadcast %cst_24 : f32 to vector<8x32xf32>
    %34 = arith.mulf %33, %32 : vector<8x32xf32>
    %cst_25 = arith.constant 5.000000e-01 : f32
    %35 = vector.broadcast %cst_25 : f32 to vector<8x32xf32>
    %36 = arith.addf %34, %35 : vector<8x32xf32>
    %37 = vector.extract_strided_slice %20 {offsets = [0, 64], sizes = [8, 32], strides = [1, 1]} : vector<8x128xf32> to vector<8x32xf32>
    %38 = math.tanh %37 : vector<8x32xf32>
    %39 = vector.extract_strided_slice %20 {offsets = [0, 96], sizes = [8, 32], strides = [1, 1]} : vector<8x128xf32> to vector<8x32xf32>
    %cst_26 = arith.constant 5.000000e-01 : f32
    %40 = vector.broadcast %cst_26 : f32 to vector<8x32xf32>
    %41 = arith.mulf %40, %39 : vector<8x32xf32>
    %42 = math.tanh %41 : vector<8x32xf32>
    %cst_27 = arith.constant 5.000000e-01 : f32
    %43 = vector.broadcast %cst_27 : f32 to vector<8x32xf32>
    %44 = arith.mulf %43, %42 : vector<8x32xf32>
    %cst_28 = arith.constant 5.000000e-01 : f32
    %45 = vector.broadcast %cst_28 : f32 to vector<8x32xf32>
    %46 = arith.addf %44, %45 : vector<8x32xf32>
    %47 = arith.mulf %36, %14 : vector<8x32xf32>
    %48 = arith.mulf %28, %38 : vector<8x32xf32>
    %49 = arith.addf %47, %48 : vector<8x32xf32>
    %50 = math.tanh %49 : vector<8x32xf32>
    %51 = arith.mulf %46, %50 : vector<8x32xf32>
    %52 = arith.truncf %51 : vector<8x32xf32> to vector<8x32xbf16>
    %53 = arith.index_cast %c0_i32_16 : i32 to index
    %c0_29 = arith.constant 0 : index
    %c0_30 = arith.constant 0 : index
    %54 = vector.load %arg8[%53, %c0_29, %c0_30] : memref<8x8x32xbf16, #tpu.memory_space<vmem>>, vector<1x8x32xbf16>
    %55 = vector.shape_cast %54 : vector<1x8x32xbf16> to vector<8x32xbf16>
    %56 = vector.shape_cast %52 : vector<8x32xbf16> to vector<1x8x32xbf16>
    tpu.vector_store %arg8[%53, %c0_29, %c0_30], %56 {strides = array<i32>} : memref<8x8x32xbf16, #tpu.memory_space<vmem>>, vector<1x8x32xbf16>,
    %c1_i32 = arith.constant 1 : i32
    %57 = arith.index_cast %c1_i32 : i32 to index
    %c0_31 = arith.constant 0 : index
    %c0_32 = arith.constant 0 : index
    %58 = vector.load %arg11[%57, %c0_31, %c0_32] : memref<8x8x128xf32, #tpu.memory_space<vmem>>, vector<1x8x128xf32>
    %59 = vector.shape_cast %58 : vector<1x8x128xf32> to vector<8x128xf32>
    %60 = arith.truncf %51 : vector<8x32xf32> to vector<8x32xbf16>
    %cst_33 = arith.constant dense<0.000000e+00> : vector<8x128xf32>
    %61 = tpu.matmul %60, %12, %cst_33 {dimension_numbers = #tpu.dot_dimension_numbers<[1], [0], [0], [1], [0, 0, 1, 1], [], []>} : vector<8x32xbf16>, vector<32x128xbf16>, vector<8x128xf32> -> vector<8x128xf32>
    %62 = arith.addf %59, %61 : vector<8x128xf32>
    %63 = vector.extract_strided_slice %62 {offsets = [0, 0], sizes = [8, 32], strides = [1, 1]} : vector<8x128xf32> to vector<8x32xf32>
    %cst_34 = arith.constant 5.000000e-01 : f32
    %64 = vector.broadcast %cst_34 : f32 to vector<8x32xf32>
    %65 = arith.mulf %64, %63 : vector<8x32xf32>
    %66 = math.tanh %65 : vector<8x32xf32>
    %cst_35 = arith.constant 5.000000e-01 : f32
    %67 = vector.broadcast %cst_35 : f32 to vector<8x32xf32>
    %68 = arith.mulf %67, %66 : vector<8x32xf32>
    %cst_36 = arith.constant 5.000000e-01 : f32
    %69 = vector.broadcast %cst_36 : f32 to vector<8x32xf32>
    %70 = arith.addf %68, %69 : vector<8x32xf32>
    %71 = vector.extract_strided_slice %62 {offsets = [0, 32], sizes = [8, 32], strides = [1, 1]} : vector<8x128xf32> to vector<8x32xf32>
    %cst_37 = arith.constant 5.000000e-01 : f32
    %72 = vector.broadcast %cst_37 : f32 to vector<8x32xf32>
    %73 = arith.mulf %72, %71 : vector<8x32xf32>
    %74 = math.tanh %73 : vector<8x32xf32>
    %cst_38 = arith.constant 5.000000e-01 : f32
    %75 = vector.broadcast %cst_38 : f32 to vector<8x32xf32>
    %76 = arith.mulf %75, %74 : vector<8x32xf32>
    %cst_39 = arith.constant 5.000000e-01 : f32
    %77 = vector.broadcast %cst_39 : f32 to vector<8x32xf32>
    %78 = arith.addf %76, %77 : vector<8x32xf32>
    %79 = vector.extract_strided_slice %62 {offsets = [0, 64], sizes = [8, 32], strides = [1, 1]} : vector<8x128xf32> to vector<8x32xf32>
    %80 = math.tanh %79 : vector<8x32xf32>
    %81 = vector.extract_strided_slice %62 {offsets = [0, 96], sizes = [8, 32], strides = [1, 1]} : vector<8x128xf32> to vector<8x32xf32>
    %cst_40 = arith.constant 5.000000e-01 : f32
    %82 = vector.broadcast %cst_40 : f32 to vector<8x32xf32>
    %83 = arith.mulf %82, %81 : vector<8x32xf32>
    %84 = math.tanh %83 : vector<8x32xf32>
    %cst_41 = arith.constant 5.000000e-01 : f32
    %85 = vector.broadcast %cst_41 : f32 to vector<8x32xf32>
    %86 = arith.mulf %85, %84 : vector<8x32xf32>
    %cst_42 = arith.constant 5.000000e-01 : f32
    %87 = vector.broadcast %cst_42 : f32 to vector<8x32xf32>
    %88 = arith.addf %86, %87 : vector<8x32xf32>
    %89 = arith.mulf %78, %49 : vector<8x32xf32>
    %90 = arith.mulf %70, %80 : vector<8x32xf32>
    %91 = arith.addf %89, %90 : vector<8x32xf32>
    %92 = math.tanh %91 : vector<8x32xf32>
    %93 = arith.mulf %88, %92 : vector<8x32xf32>
    %94 = arith.truncf %93 : vector<8x32xf32> to vector<8x32xbf16>
    %95 = arith.index_cast %c1_i32 : i32 to index
    %c0_43 = arith.constant 0 : index
    %c0_44 = arith.constant 0 : index
    %96 = vector.load %arg8[%95, %c0_43, %c0_44] : memref<8x8x32xbf16, #tpu.memory_space<vmem>>, vector<1x8x32xbf16>
    %97 = vector.shape_cast %96 : vector<1x8x32xbf16> to vector<8x32xbf16>
    %98 = vector.shape_cast %94 : vector<8x32xbf16> to vector<1x8x32xbf16>
    tpu.vector_store %arg8[%95, %c0_43, %c0_44], %98 {strides = array<i32>} : memref<8x8x32xbf16, #tpu.memory_space<vmem>>, vector<1x8x32xbf16>,
    %c2_i32 = arith.constant 2 : i32
    %99 = arith.index_cast %c2_i32 : i32 to index
    %c0_45 = arith.constant 0 : index
    %c0_46 = arith.constant 0 : index
    %100 = vector.load %arg11[%99, %c0_45, %c0_46] : memref<8x8x128xf32, #tpu.memory_space<vmem>>, vector<1x8x128xf32>
    %101 = vector.shape_cast %100 : vector<1x8x128xf32> to vector<8x128xf32>
    %102 = arith.truncf %93 : vector<8x32xf32> to vector<8x32xbf16>
    %cst_47 = arith.constant dense<0.000000e+00> : vector<8x128xf32>
    %103 = tpu.matmul %102, %12, %cst_47 {dimension_numbers = #tpu.dot_dimension_numbers<[1], [0], [0], [1], [0, 0, 1, 1], [], []>} : vector<8x32xbf16>, vector<32x128xbf16>, vector<8x128xf32> -> vector<8x128xf32>
    %104 = arith.addf %101, %103 : vector<8x128xf32>
    %105 = vector.extract_strided_slice %104 {offsets = [0, 0], sizes = [8, 32], strides = [1, 1]} : vector<8x128xf32> to vector<8x32xf32>
    %cst_48 = arith.constant 5.000000e-01 : f32
    %106 = vector.broadcast %cst_48 : f32 to vector<8x32xf32>
    %107 = arith.mulf %106, %105 : vector<8x32xf32>
    %108 = math.tanh %107 : vector<8x32xf32>
    %cst_49 = arith.constant 5.000000e-01 : f32
    %109 = vector.broadcast %cst_49 : f32 to vector<8x32xf32>
    %110 = arith.mulf %109, %108 : vector<8x32xf32>
    %cst_50 = arith.constant 5.000000e-01 : f32
    %111 = vector.broadcast %cst_50 : f32 to vector<8x32xf32>
    %112 = arith.addf %110, %111 : vector<8x32xf32>
    %113 = vector.extract_strided_slice %104 {offsets = [0, 32], sizes = [8, 32], strides = [1, 1]} : vector<8x128xf32> to vector<8x32xf32>
    %cst_51 = arith.constant 5.000000e-01 : f32
    %114 = vector.broadcast %cst_51 : f32 to vector<8x32xf32>
    %115 = arith.mulf %114, %113 : vector<8x32xf32>
    %116 = math.tanh %115 : vector<8x32xf32>
    %cst_52 = arith.constant 5.000000e-01 : f32
    %117 = vector.broadcast %cst_52 : f32 to vector<8x32xf32>
    %118 = arith.mulf %117, %116 : vector<8x32xf32>
    %cst_53 = arith.constant 5.000000e-01 : f32
    %119 = vector.broadcast %cst_53 : f32 to vector<8x32xf32>
    %120 = arith.addf %118, %119 : vector<8x32xf32>
    %121 = vector.extract_strided_slice %104 {offsets = [0, 64], sizes = [8, 32], strides = [1, 1]} : vector<8x128xf32> to vector<8x32xf32>
    %122 = math.tanh %121 : vector<8x32xf32>
    %123 = vector.extract_strided_slice %104 {offsets = [0, 96], sizes = [8, 32], strides = [1, 1]} : vector<8x128xf32> to vector<8x32xf32>
    %cst_54 = arith.constant 5.000000e-01 : f32
    %124 = vector.broadcast %cst_54 : f32 to vector<8x32xf32>
    %125 = arith.mulf %124, %123 : vector<8x32xf32>
    %126 = math.tanh %125 : vector<8x32xf32>
    %cst_55 = arith.constant 5.000000e-01 : f32
    %127 = vector.broadcast %cst_55 : f32 to vector<8x32xf32>
    %128 = arith.mulf %127, %126 : vector<8x32xf32>
    %cst_56 = arith.constant 5.000000e-01 : f32
    %129 = vector.broadcast %cst_56 : f32 to vector<8x32xf32>
    %130 = arith.addf %128, %129 : vector<8x32xf32>
    %131 = arith.mulf %120, %91 : vector<8x32xf32>
    %132 = arith.mulf %112, %122 : vector<8x32xf32>
    %133 = arith.addf %131, %132 : vector<8x32xf32>
    %134 = math.tanh %133 : vector<8x32xf32>
    %135 = arith.mulf %130, %134 : vector<8x32xf32>
    %136 = arith.truncf %135 : vector<8x32xf32> to vector<8x32xbf16>
    %137 = arith.index_cast %c2_i32 : i32 to index
    %c0_57 = arith.constant 0 : index
    %c0_58 = arith.constant 0 : index
    %138 = vector.load %arg8[%137, %c0_57, %c0_58] : memref<8x8x32xbf16, #tpu.memory_space<vmem>>, vector<1x8x32xbf16>
    %139 = vector.shape_cast %138 : vector<1x8x32xbf16> to vector<8x32xbf16>
    %140 = vector.shape_cast %136 : vector<8x32xbf16> to vector<1x8x32xbf16>
    tpu.vector_store %arg8[%137, %c0_57, %c0_58], %140 {strides = array<i32>} : memref<8x8x32xbf16, #tpu.memory_space<vmem>>, vector<1x8x32xbf16>,
    %c3_i32 = arith.constant 3 : i32
    %141 = arith.index_cast %c3_i32 : i32 to index
    %c0_59 = arith.constant 0 : index
    %c0_60 = arith.constant 0 : index
    %142 = vector.load %arg11[%141, %c0_59, %c0_60] : memref<8x8x128xf32, #tpu.memory_space<vmem>>, vector<1x8x128xf32>
    %143 = vector.shape_cast %142 : vector<1x8x128xf32> to vector<8x128xf32>
    %144 = arith.truncf %135 : vector<8x32xf32> to vector<8x32xbf16>
    %cst_61 = arith.constant dense<0.000000e+00> : vector<8x128xf32>
    %145 = tpu.matmul %144, %12, %cst_61 {dimension_numbers = #tpu.dot_dimension_numbers<[1], [0], [0], [1], [0, 0, 1, 1], [], []>} : vector<8x32xbf16>, vector<32x128xbf16>, vector<8x128xf32> -> vector<8x128xf32>
    %146 = arith.addf %143, %145 : vector<8x128xf32>
    %147 = vector.extract_strided_slice %146 {offsets = [0, 0], sizes = [8, 32], strides = [1, 1]} : vector<8x128xf32> to vector<8x32xf32>
    %cst_62 = arith.constant 5.000000e-01 : f32
    %148 = vector.broadcast %cst_62 : f32 to vector<8x32xf32>
    %149 = arith.mulf %148, %147 : vector<8x32xf32>
    %150 = math.tanh %149 : vector<8x32xf32>
    %cst_63 = arith.constant 5.000000e-01 : f32
    %151 = vector.broadcast %cst_63 : f32 to vector<8x32xf32>
    %152 = arith.mulf %151, %150 : vector<8x32xf32>
    %cst_64 = arith.constant 5.000000e-01 : f32
    %153 = vector.broadcast %cst_64 : f32 to vector<8x32xf32>
    %154 = arith.addf %152, %153 : vector<8x32xf32>
    %155 = vector.extract_strided_slice %146 {offsets = [0, 32], sizes = [8, 32], strides = [1, 1]} : vector<8x128xf32> to vector<8x32xf32>
    %cst_65 = arith.constant 5.000000e-01 : f32
    %156 = vector.broadcast %cst_65 : f32 to vector<8x32xf32>
    %157 = arith.mulf %156, %155 : vector<8x32xf32>
    %158 = math.tanh %157 : vector<8x32xf32>
    %cst_66 = arith.constant 5.000000e-01 : f32
    %159 = vector.broadcast %cst_66 : f32 to vector<8x32xf32>
    %160 = arith.mulf %159, %158 : vector<8x32xf32>
    %cst_67 = arith.constant 5.000000e-01 : f32
    %161 = vector.broadcast %cst_67 : f32 to vector<8x32xf32>
    %162 = arith.addf %160, %161 : vector<8x32xf32>
    %163 = vector.extract_strided_slice %146 {offsets = [0, 64], sizes = [8, 32], strides = [1, 1]} : vector<8x128xf32> to vector<8x32xf32>
    %164 = math.tanh %163 : vector<8x32xf32>
    %165 = vector.extract_strided_slice %146 {offsets = [0, 96], sizes = [8, 32], strides = [1, 1]} : vector<8x128xf32> to vector<8x32xf32>
    %cst_68 = arith.constant 5.000000e-01 : f32
    %166 = vector.broadcast %cst_68 : f32 to vector<8x32xf32>
    %167 = arith.mulf %166, %165 : vector<8x32xf32>
    %168 = math.tanh %167 : vector<8x32xf32>
    %cst_69 = arith.constant 5.000000e-01 : f32
    %169 = vector.broadcast %cst_69 : f32 to vector<8x32xf32>
    %170 = arith.mulf %169, %168 : vector<8x32xf32>
    %cst_70 = arith.constant 5.000000e-01 : f32
    %171 = vector.broadcast %cst_70 : f32 to vector<8x32xf32>
    %172 = arith.addf %170, %171 : vector<8x32xf32>
    %173 = arith.mulf %162, %133 : vector<8x32xf32>
    %174 = arith.mulf %154, %164 : vector<8x32xf32>
    %175 = arith.addf %173, %174 : vector<8x32xf32>
    %176 = math.tanh %175 : vector<8x32xf32>
    %177 = arith.mulf %172, %176 : vector<8x32xf32>
    %178 = arith.truncf %177 : vector<8x32xf32> to vector<8x32xbf16>
    %179 = arith.index_cast %c3_i32 : i32 to index
    %c0_71 = arith.constant 0 : index
    %c0_72 = arith.constant 0 : index
    %180 = vector.load %arg8[%179, %c0_71, %c0_72] : memref<8x8x32xbf16, #tpu.memory_space<vmem>>, vector<1x8x32xbf16>
    %181 = vector.shape_cast %180 : vector<1x8x32xbf16> to vector<8x32xbf16>
    %182 = vector.shape_cast %178 : vector<8x32xbf16> to vector<1x8x32xbf16>
    tpu.vector_store %arg8[%179, %c0_71, %c0_72], %182 {strides = array<i32>} : memref<8x8x32xbf16, #tpu.memory_space<vmem>>, vector<1x8x32xbf16>,
    %c4_i32 = arith.constant 4 : i32
    %183 = arith.index_cast %c4_i32 : i32 to index
    %c0_73 = arith.constant 0 : index
    %c0_74 = arith.constant 0 : index
    %184 = vector.load %arg11[%183, %c0_73, %c0_74] : memref<8x8x128xf32, #tpu.memory_space<vmem>>, vector<1x8x128xf32>
    %185 = vector.shape_cast %184 : vector<1x8x128xf32> to vector<8x128xf32>
    %186 = arith.truncf %177 : vector<8x32xf32> to vector<8x32xbf16>
    %cst_75 = arith.constant dense<0.000000e+00> : vector<8x128xf32>
    %187 = tpu.matmul %186, %12, %cst_75 {dimension_numbers = #tpu.dot_dimension_numbers<[1], [0], [0], [1], [0, 0, 1, 1], [], []>} : vector<8x32xbf16>, vector<32x128xbf16>, vector<8x128xf32> -> vector<8x128xf32>
    %188 = arith.addf %185, %187 : vector<8x128xf32>
    %189 = vector.extract_strided_slice %188 {offsets = [0, 0], sizes = [8, 32], strides = [1, 1]} : vector<8x128xf32> to vector<8x32xf32>
    %cst_76 = arith.constant 5.000000e-01 : f32
    %190 = vector.broadcast %cst_76 : f32 to vector<8x32xf32>
    %191 = arith.mulf %190, %189 : vector<8x32xf32>
    %192 = math.tanh %191 : vector<8x32xf32>
    %cst_77 = arith.constant 5.000000e-01 : f32
    %193 = vector.broadcast %cst_77 : f32 to vector<8x32xf32>
    %194 = arith.mulf %193, %192 : vector<8x32xf32>
    %cst_78 = arith.constant 5.000000e-01 : f32
    %195 = vector.broadcast %cst_78 : f32 to vector<8x32xf32>
    %196 = arith.addf %194, %195 : vector<8x32xf32>
    %197 = vector.extract_strided_slice %188 {offsets = [0, 32], sizes = [8, 32], strides = [1, 1]} : vector<8x128xf32> to vector<8x32xf32>
    %cst_79 = arith.constant 5.000000e-01 : f32
    %198 = vector.broadcast %cst_79 : f32 to vector<8x32xf32>
    %199 = arith.mulf %198, %197 : vector<8x32xf32>
    %200 = math.tanh %199 : vector<8x32xf32>
    %cst_80 = arith.constant 5.000000e-01 : f32
    %201 = vector.broadcast %cst_80 : f32 to vector<8x32xf32>
    %202 = arith.mulf %201, %200 : vector<8x32xf32>
    %cst_81 = arith.constant 5.000000e-01 : f32
    %203 = vector.broadcast %cst_81 : f32 to vector<8x32xf32>
    %204 = arith.addf %202, %203 : vector<8x32xf32>
    %205 = vector.extract_strided_slice %188 {offsets = [0, 64], sizes = [8, 32], strides = [1, 1]} : vector<8x128xf32> to vector<8x32xf32>
    %206 = math.tanh %205 : vector<8x32xf32>
    %207 = vector.extract_strided_slice %188 {offsets = [0, 96], sizes = [8, 32], strides = [1, 1]} : vector<8x128xf32> to vector<8x32xf32>
    %cst_82 = arith.constant 5.000000e-01 : f32
    %208 = vector.broadcast %cst_82 : f32 to vector<8x32xf32>
    %209 = arith.mulf %208, %207 : vector<8x32xf32>
    %210 = math.tanh %209 : vector<8x32xf32>
    %cst_83 = arith.constant 5.000000e-01 : f32
    %211 = vector.broadcast %cst_83 : f32 to vector<8x32xf32>
    %212 = arith.mulf %211, %210 : vector<8x32xf32>
    %cst_84 = arith.constant 5.000000e-01 : f32
    %213 = vector.broadcast %cst_84 : f32 to vector<8x32xf32>
    %214 = arith.addf %212, %213 : vector<8x32xf32>
    %215 = arith.mulf %204, %175 : vector<8x32xf32>
    %216 = arith.mulf %196, %206 : vector<8x32xf32>
    %217 = arith.addf %215, %216 : vector<8x32xf32>
    %218 = math.tanh %217 : vector<8x32xf32>
    %219 = arith.mulf %214, %218 : vector<8x32xf32>
    %220 = arith.truncf %219 : vector<8x32xf32> to vector<8x32xbf16>
    %221 = arith.index_cast %c4_i32 : i32 to index
    %c0_85 = arith.constant 0 : index
    %c0_86 = arith.constant 0 : index
    %222 = vector.load %arg8[%221, %c0_85, %c0_86] : memref<8x8x32xbf16, #tpu.memory_space<vmem>>, vector<1x8x32xbf16>
    %223 = vector.shape_cast %222 : vector<1x8x32xbf16> to vector<8x32xbf16>
    %224 = vector.shape_cast %220 : vector<8x32xbf16> to vector<1x8x32xbf16>
    tpu.vector_store %arg8[%221, %c0_85, %c0_86], %224 {strides = array<i32>} : memref<8x8x32xbf16, #tpu.memory_space<vmem>>, vector<1x8x32xbf16>,
    %c5_i32 = arith.constant 5 : i32
    %225 = arith.index_cast %c5_i32 : i32 to index
    %c0_87 = arith.constant 0 : index
    %c0_88 = arith.constant 0 : index
    %226 = vector.load %arg11[%225, %c0_87, %c0_88] : memref<8x8x128xf32, #tpu.memory_space<vmem>>, vector<1x8x128xf32>
    %227 = vector.shape_cast %226 : vector<1x8x128xf32> to vector<8x128xf32>
    %228 = arith.truncf %219 : vector<8x32xf32> to vector<8x32xbf16>
    %cst_89 = arith.constant dense<0.000000e+00> : vector<8x128xf32>
    %229 = tpu.matmul %228, %12, %cst_89 {dimension_numbers = #tpu.dot_dimension_numbers<[1], [0], [0], [1], [0, 0, 1, 1], [], []>} : vector<8x32xbf16>, vector<32x128xbf16>, vector<8x128xf32> -> vector<8x128xf32>
    %230 = arith.addf %227, %229 : vector<8x128xf32>
    %231 = vector.extract_strided_slice %230 {offsets = [0, 0], sizes = [8, 32], strides = [1, 1]} : vector<8x128xf32> to vector<8x32xf32>
    %cst_90 = arith.constant 5.000000e-01 : f32
    %232 = vector.broadcast %cst_90 : f32 to vector<8x32xf32>
    %233 = arith.mulf %232, %231 : vector<8x32xf32>
    %234 = math.tanh %233 : vector<8x32xf32>
    %cst_91 = arith.constant 5.000000e-01 : f32
    %235 = vector.broadcast %cst_91 : f32 to vector<8x32xf32>
    %236 = arith.mulf %235, %234 : vector<8x32xf32>
    %cst_92 = arith.constant 5.000000e-01 : f32
    %237 = vector.broadcast %cst_92 : f32 to vector<8x32xf32>
    %238 = arith.addf %236, %237 : vector<8x32xf32>
    %239 = vector.extract_strided_slice %230 {offsets = [0, 32], sizes = [8, 32], strides = [1, 1]} : vector<8x128xf32> to vector<8x32xf32>
    %cst_93 = arith.constant 5.000000e-01 : f32
    %240 = vector.broadcast %cst_93 : f32 to vector<8x32xf32>
    %241 = arith.mulf %240, %239 : vector<8x32xf32>
    %242 = math.tanh %241 : vector<8x32xf32>
    %cst_94 = arith.constant 5.000000e-01 : f32
    %243 = vector.broadcast %cst_94 : f32 to vector<8x32xf32>
    %244 = arith.mulf %243, %242 : vector<8x32xf32>
    %cst_95 = arith.constant 5.000000e-01 : f32
    %245 = vector.broadcast %cst_95 : f32 to vector<8x32xf32>
    %246 = arith.addf %244, %245 : vector<8x32xf32>
    %247 = vector.extract_strided_slice %230 {offsets = [0, 64], sizes = [8, 32], strides = [1, 1]} : vector<8x128xf32> to vector<8x32xf32>
    %248 = math.tanh %247 : vector<8x32xf32>
    %249 = vector.extract_strided_slice %230 {offsets = [0, 96], sizes = [8, 32], strides = [1, 1]} : vector<8x128xf32> to vector<8x32xf32>
    %cst_96 = arith.constant 5.000000e-01 : f32
    %250 = vector.broadcast %cst_96 : f32 to vector<8x32xf32>
    %251 = arith.mulf %250, %249 : vector<8x32xf32>
    %252 = math.tanh %251 : vector<8x32xf32>
    %cst_97 = arith.constant 5.000000e-01 : f32
    %253 = vector.broadcast %cst_97 : f32 to vector<8x32xf32>
    %254 = arith.mulf %253, %252 : vector<8x32xf32>
    %cst_98 = arith.constant 5.000000e-01 : f32
    %255 = vector.broadcast %cst_98 : f32 to vector<8x32xf32>
    %256 = arith.addf %254, %255 : vector<8x32xf32>
    %257 = arith.mulf %246, %217 : vector<8x32xf32>
    %258 = arith.mulf %238, %248 : vector<8x32xf32>
    %259 = arith.addf %257, %258 : vector<8x32xf32>
    %260 = math.tanh %259 : vector<8x32xf32>
    %261 = arith.mulf %256, %260 : vector<8x32xf32>
    %262 = arith.truncf %261 : vector<8x32xf32> to vector<8x32xbf16>
    %263 = arith.index_cast %c5_i32 : i32 to index
    %c0_99 = arith.constant 0 : index
    %c0_100 = arith.constant 0 : index
    %264 = vector.load %arg8[%263, %c0_99, %c0_100] : memref<8x8x32xbf16, #tpu.memory_space<vmem>>, vector<1x8x32xbf16>
    %265 = vector.shape_cast %264 : vector<1x8x32xbf16> to vector<8x32xbf16>
    %266 = vector.shape_cast %262 : vector<8x32xbf16> to vector<1x8x32xbf16>
    tpu.vector_store %arg8[%263, %c0_99, %c0_100], %266 {strides = array<i32>} : memref<8x8x32xbf16, #tpu.memory_space<vmem>>, vector<1x8x32xbf16>,
    %c6_i32 = arith.constant 6 : i32
    %267 = arith.index_cast %c6_i32 : i32 to index
    %c0_101 = arith.constant 0 : index
    %c0_102 = arith.constant 0 : index
    %268 = vector.load %arg11[%267, %c0_101, %c0_102] : memref<8x8x128xf32, #tpu.memory_space<vmem>>, vector<1x8x128xf32>
    %269 = vector.shape_cast %268 : vector<1x8x128xf32> to vector<8x128xf32>
    %270 = arith.truncf %261 : vector<8x32xf32> to vector<8x32xbf16>
    %cst_103 = arith.constant dense<0.000000e+00> : vector<8x128xf32>
    %271 = tpu.matmul %270, %12, %cst_103 {dimension_numbers = #tpu.dot_dimension_numbers<[1], [0], [0], [1], [0, 0, 1, 1], [], []>} : vector<8x32xbf16>, vector<32x128xbf16>, vector<8x128xf32> -> vector<8x128xf32>
    %272 = arith.addf %269, %271 : vector<8x128xf32>
    %273 = vector.extract_strided_slice %272 {offsets = [0, 0], sizes = [8, 32], strides = [1, 1]} : vector<8x128xf32> to vector<8x32xf32>
    %cst_104 = arith.constant 5.000000e-01 : f32
    %274 = vector.broadcast %cst_104 : f32 to vector<8x32xf32>
    %275 = arith.mulf %274, %273 : vector<8x32xf32>
    %276 = math.tanh %275 : vector<8x32xf32>
    %cst_105 = arith.constant 5.000000e-01 : f32
    %277 = vector.broadcast %cst_105 : f32 to vector<8x32xf32>
    %278 = arith.mulf %277, %276 : vector<8x32xf32>
    %cst_106 = arith.constant 5.000000e-01 : f32
    %279 = vector.broadcast %cst_106 : f32 to vector<8x32xf32>
    %280 = arith.addf %278, %279 : vector<8x32xf32>
    %281 = vector.extract_strided_slice %272 {offsets = [0, 32], sizes = [8, 32], strides = [1, 1]} : vector<8x128xf32> to vector<8x32xf32>
    %cst_107 = arith.constant 5.000000e-01 : f32
    %282 = vector.broadcast %cst_107 : f32 to vector<8x32xf32>
    %283 = arith.mulf %282, %281 : vector<8x32xf32>
    %284 = math.tanh %283 : vector<8x32xf32>
    %cst_108 = arith.constant 5.000000e-01 : f32
    %285 = vector.broadcast %cst_108 : f32 to vector<8x32xf32>
    %286 = arith.mulf %285, %284 : vector<8x32xf32>
    %cst_109 = arith.constant 5.000000e-01 : f32
    %287 = vector.broadcast %cst_109 : f32 to vector<8x32xf32>
    %288 = arith.addf %286, %287 : vector<8x32xf32>
    %289 = vector.extract_strided_slice %272 {offsets = [0, 64], sizes = [8, 32], strides = [1, 1]} : vector<8x128xf32> to vector<8x32xf32>
    %290 = math.tanh %289 : vector<8x32xf32>
    %291 = vector.extract_strided_slice %272 {offsets = [0, 96], sizes = [8, 32], strides = [1, 1]} : vector<8x128xf32> to vector<8x32xf32>
    %cst_110 = arith.constant 5.000000e-01 : f32
    %292 = vector.broadcast %cst_110 : f32 to vector<8x32xf32>
    %293 = arith.mulf %292, %291 : vector<8x32xf32>
    %294 = math.tanh %293 : vector<8x32xf32>
    %cst_111 = arith.constant 5.000000e-01 : f32
    %295 = vector.broadcast %cst_111 : f32 to vector<8x32xf32>
    %296 = arith.mulf %295, %294 : vector<8x32xf32>
    %cst_112 = arith.constant 5.000000e-01 : f32
    %297 = vector.broadcast %cst_112 : f32 to vector<8x32xf32>
    %298 = arith.addf %296, %297 : vector<8x32xf32>
    %299 = arith.mulf %288, %259 : vector<8x32xf32>
    %300 = arith.mulf %280, %290 : vector<8x32xf32>
    %301 = arith.addf %299, %300 : vector<8x32xf32>
    %302 = math.tanh %301 : vector<8x32xf32>
    %303 = arith.mulf %298, %302 : vector<8x32xf32>
    %304 = arith.truncf %303 : vector<8x32xf32> to vector<8x32xbf16>
    %305 = arith.index_cast %c6_i32 : i32 to index
    %c0_113 = arith.constant 0 : index
    %c0_114 = arith.constant 0 : index
    %306 = vector.load %arg8[%305, %c0_113, %c0_114] : memref<8x8x32xbf16, #tpu.memory_space<vmem>>, vector<1x8x32xbf16>
    %307 = vector.shape_cast %306 : vector<1x8x32xbf16> to vector<8x32xbf16>
    %308 = vector.shape_cast %304 : vector<8x32xbf16> to vector<1x8x32xbf16>
    tpu.vector_store %arg8[%305, %c0_113, %c0_114], %308 {strides = array<i32>} : memref<8x8x32xbf16, #tpu.memory_space<vmem>>, vector<1x8x32xbf16>,
    %c7_i32 = arith.constant 7 : i32
    %309 = arith.index_cast %c7_i32 : i32 to index
    %c0_115 = arith.constant 0 : index
    %c0_116 = arith.constant 0 : index
    %310 = vector.load %arg11[%309, %c0_115, %c0_116] : memref<8x8x128xf32, #tpu.memory_space<vmem>>, vector<1x8x128xf32>
    %311 = vector.shape_cast %310 : vector<1x8x128xf32> to vector<8x128xf32>
    %312 = arith.truncf %303 : vector<8x32xf32> to vector<8x32xbf16>
    %cst_117 = arith.constant dense<0.000000e+00> : vector<8x128xf32>
    %313 = tpu.matmul %312, %12, %cst_117 {dimension_numbers = #tpu.dot_dimension_numbers<[1], [0], [0], [1], [0, 0, 1, 1], [], []>} : vector<8x32xbf16>, vector<32x128xbf16>, vector<8x128xf32> -> vector<8x128xf32>
    %314 = arith.addf %311, %313 : vector<8x128xf32>
    %315 = vector.extract_strided_slice %314 {offsets = [0, 0], sizes = [8, 32], strides = [1, 1]} : vector<8x128xf32> to vector<8x32xf32>
    %cst_118 = arith.constant 5.000000e-01 : f32
    %316 = vector.broadcast %cst_118 : f32 to vector<8x32xf32>
    %317 = arith.mulf %316, %315 : vector<8x32xf32>
    %318 = math.tanh %317 : vector<8x32xf32>
    %cst_119 = arith.constant 5.000000e-01 : f32
    %319 = vector.broadcast %cst_119 : f32 to vector<8x32xf32>
    %320 = arith.mulf %319, %318 : vector<8x32xf32>
    %cst_120 = arith.constant 5.000000e-01 : f32
    %321 = vector.broadcast %cst_120 : f32 to vector<8x32xf32>
    %322 = arith.addf %320, %321 : vector<8x32xf32>
    %323 = vector.extract_strided_slice %314 {offsets = [0, 32], sizes = [8, 32], strides = [1, 1]} : vector<8x128xf32> to vector<8x32xf32>
    %cst_121 = arith.constant 5.000000e-01 : f32
    %324 = vector.broadcast %cst_121 : f32 to vector<8x32xf32>
    %325 = arith.mulf %324, %323 : vector<8x32xf32>
    %326 = math.tanh %325 : vector<8x32xf32>
    %cst_122 = arith.constant 5.000000e-01 : f32
    %327 = vector.broadcast %cst_122 : f32 to vector<8x32xf32>
    %328 = arith.mulf %327, %326 : vector<8x32xf32>
    %cst_123 = arith.constant 5.000000e-01 : f32
    %329 = vector.broadcast %cst_123 : f32 to vector<8x32xf32>
    %330 = arith.addf %328, %329 : vector<8x32xf32>
    %331 = vector.extract_strided_slice %314 {offsets = [0, 64], sizes = [8, 32], strides = [1, 1]} : vector<8x128xf32> to vector<8x32xf32>
    %332 = math.tanh %331 : vector<8x32xf32>
    %333 = vector.extract_strided_slice %314 {offsets = [0, 96], sizes = [8, 32], strides = [1, 1]} : vector<8x128xf32> to vector<8x32xf32>
    %cst_124 = arith.constant 5.000000e-01 : f32
    %334 = vector.broadcast %cst_124 : f32 to vector<8x32xf32>
    %335 = arith.mulf %334, %333 : vector<8x32xf32>
    %336 = math.tanh %335 : vector<8x32xf32>
    %cst_125 = arith.constant 5.000000e-01 : f32
    %337 = vector.broadcast %cst_125 : f32 to vector<8x32xf32>
    %338 = arith.mulf %337, %336 : vector<8x32xf32>
    %cst_126 = arith.constant 5.000000e-01 : f32
    %339 = vector.broadcast %cst_126 : f32 to vector<8x32xf32>
    %340 = arith.addf %338, %339 : vector<8x32xf32>
    %341 = arith.mulf %330, %301 : vector<8x32xf32>
    %342 = arith.mulf %322, %332 : vector<8x32xf32>
    %343 = arith.addf %341, %342 : vector<8x32xf32>
    %344 = math.tanh %343 : vector<8x32xf32>
    %345 = arith.mulf %340, %344 : vector<8x32xf32>
    %346 = arith.truncf %345 : vector<8x32xf32> to vector<8x32xbf16>
    %347 = arith.index_cast %c7_i32 : i32 to index
    %c0_127 = arith.constant 0 : index
    %c0_128 = arith.constant 0 : index
    %348 = vector.load %arg8[%347, %c0_127, %c0_128] : memref<8x8x32xbf16, #tpu.memory_space<vmem>>, vector<1x8x32xbf16>
    %349 = vector.shape_cast %348 : vector<1x8x32xbf16> to vector<8x32xbf16>
    %350 = vector.shape_cast %346 : vector<8x32xbf16> to vector<1x8x32xbf16>
    tpu.vector_store %arg8[%347, %c0_127, %c0_128], %350 {strides = array<i32>} : memref<8x8x32xbf16, #tpu.memory_space<vmem>>, vector<1x8x32xbf16>,
    %c8_i32 = arith.constant 8 : i32
    %c0_129 = arith.constant 0 : index
    %c0_130 = arith.constant 0 : index
    %351 = vector.load %arg9[%c0_129, %c0_130] : memref<8x32xf32, #tpu.memory_space<vmem>>, vector<8x32xf32>
    tpu.vector_store %arg9[%c0_129, %c0_130], %345 {strides = array<i32>} : memref<8x32xf32, #tpu.memory_space<vmem>>, vector<8x32xf32>,
    %c0_131 = arith.constant 0 : index
    %c0_132 = arith.constant 0 : index
    %352 = vector.load %arg10[%c0_131, %c0_132] : memref<8x32xf32, #tpu.memory_space<vmem>>, vector<8x32xf32>
    tpu.vector_store %arg10[%c0_131, %c0_132], %343 {strides = array<i32>} : memref<8x32xf32, #tpu.memory_space<vmem>>, vector<8x32xf32>,
    return
  }
  func.func @transform_0(%arg0: i32, %arg1: i32) -> (i32, i32, i32) {
    %c0_i32 = arith.constant 0 : i32
    %c0_i32_0 = arith.constant 0 : i32
    return %arg1, %arg0, %c0_i32 : i32, i32, i32
  }
  func.func @transform_1(%arg0: i32, %arg1: i32) -> (i32, i32) {
    %c0_i32 = arith.constant 0 : i32
    %c0_i32_0 = arith.constant 0 : i32
    %c0_i32_1 = arith.constant 0 : i32
    return %c0_i32, %c0_i32_0 : i32, i32
  }
  func.func @transform_2(%arg0: i32, %arg1: i32) -> (i32, i32) {
    %c0_i32 = arith.constant 0 : i32
    %c0_i32_0 = arith.constant 0 : i32
    %c0_i32_1 = arith.constant 0 : i32
    return %c0_i32, %c0_i32_0 : i32, i32
  }
  func.func @transform_3(%arg0: i32, %arg1: i32) -> (i32, i32) {
    %c0_i32 = arith.constant 0 : i32
    %c0_i32_0 = arith.constant 0 : i32
    %c0_i32_1 = arith.constant 0 : i32
    return %c0_i32, %c0_i32_0 : i32, i32
  }
  func.func @transform_4(%arg0: i32, %arg1: i32) -> (i32, i32) {
    %c0_i32 = arith.constant 0 : i32
    %c0_i32_0 = arith.constant 0 : i32
    return %arg0, %c0_i32 : i32, i32
  }
  func.func @transform_5(%arg0: i32, %arg1: i32) -> (i32, i32) {
    %c0_i32 = arith.constant 0 : i32
    %c0_i32_0 = arith.constant 0 : i32
    return %arg0, %c0_i32 : i32, i32
  }
  func.func @transform_6(%arg0: i32, %arg1: i32) -> (i32, i32, i32) {
    %c0_i32 = arith.constant 0 : i32
    %c0_i32_0 = arith.constant 0 : i32
    return %arg1, %arg0, %c0_i32 : i32, i32, i32
  }
  func.func @transform_7(%arg0: i32, %arg1: i32) -> (i32, i32) {
    %c0_i32 = arith.constant 0 : i32
    %c0_i32_0 = arith.constant 0 : i32
    return %arg0, %c0_i32 : i32, i32
  }
  func.func @transform_8(%arg0: i32, %arg1: i32) -> (i32, i32) {
    %c0_i32 = arith.constant 0 : i32
    %c0_i32_0 = arith.constant 0 : i32
    return %arg0, %c0_i32 : i32, i32
  }
}

</mosaic_0001>

<llo_original>
// kernel: lstm_forward.4
$region0: #{lstm_forward.4}
  #allocation0 [shape = 'u32[]', space=smem, size = 0x4, offset = 0x4, fixed_abs, tag = 'smem constant byte address 0x4 - core index']
  #allocation1 [shape = 'u32[144,128]{1,0:T(1,128)}', space=vmem, size = 0x12000, scoped, tag = 'internal scratch']
  %s0 = inlined_call_operand.hbm [shape: f32[64,16], index: 0, kind: input, shape index: {}]
  %s1 = inlined_call_operand.hbm [shape: bf16[16,32], index: 1, kind: input, shape index: {}]
  %s2 = inlined_call_operand.hbm [shape: f32[1,32], index: 2, kind: input, shape index: {}]
  %s3 = inlined_call_operand.hbm [shape: bf16[64,32], index: 3, kind: output, shape index: {}]
  %s4 = sld [smem:[#allocation0]]
  $region34: #{lstm_forward.4} parent=0
    _
  %s6 = ssub.s32 1, %s4
  %s7 = scalar_select 0, %s6, %s4
  $region1: #{lstm_forward.4} parent=0
    #allocation2 [shape = 'u8[32768]{0}', space=vmem, size = 0x8000, scoped, tag = 'input window, operand 0, single buffered']
    #allocation3 [shape = 's32[1]{0}', space=sflag, size = 0x4, scoped, tag = 'scoped memory for lstm_forward.4']
    #allocation4 [shape = 's32[1]{0}', space=sflag, size = 0x4, scoped, tag = 'scoped memory for lstm_forward.4']
    #allocation5 [shape = 'u8[4096]{0}', space=vmem, size = 0x1000, scoped, tag = 'input window, operand 1, single buffered']
    #allocation6 [shape = 's32[1]{0}', space=sflag, size = 0x4, scoped, tag = 'scoped memory for lstm_forward.4']
    #allocation7 [shape = 'u8[512]{0}', space=vmem, size = 0x400, scoped, tag = 'input window, operand 2, single buffered']
    #allocation8 [shape = 'u8[16384]{0}', space=vmem, size = 0x4000, scoped, tag = 'output window, operand 0, single buffered']
    %8 = vsyncpa [#allocation3], 0
    %9 = vsyncpa [#allocation6], 0
    %10 = vsyncpa [#allocation4], 0
    // Predicated region
    $region2: #{lstm_forward.4} parent=1 // pred_check
      _
    $region3: #{lstm_forward.4} parent=1 // pred_check_branch
      %12 = sbr.rel (0) target = $region5
    $region4: #{lstm_forward.4} parent=1 // pred_region
      %s14 = ssub.s32 1024, 1024
      %15 = vsyncadd [#allocation3], %s14
      %s16 = sshll.u32 [#allocation2], 4
      %s17 = int_to_ptr.vmem [resolvable:$true] %s16
      %22 = dma.hbm_to_vmem [thread:$0]  %s0, 1024, %s17, [#allocation3], 128, 128, 8
    $region5: #{lstm_forward.4} parent=1 // pred_fallthru
      _
    // Predicated region
    $region6: #{lstm_forward.4} parent=1 // pred_check
      _
    $region7: #{lstm_forward.4} parent=1 // pred_check_branch
      %24 = sbr.rel (0) target = $region9
    $region8: #{lstm_forward.4} parent=1 // pred_region
      %s26 = ssub.s32 128, 128
      %27 = vsyncadd [#allocation6], %s26
      %s28 = sshll.u32 [#allocation5], 4
      %s29 = int_to_ptr.vmem [resolvable:$true] %s28
      %34 = dma.hbm_to_vmem [thread:$0]  %s1, 128, %s29, [#allocation6], 64, 64, 4
    $region9: #{lstm_forward.4} parent=1 // pred_fallthru
      _
    // Predicated region
    $region10: #{lstm_forward.4} parent=1 // pred_check
      _
    $region11: #{lstm_forward.4} parent=1 // pred_check_branch
      %36 = sbr.rel (0) target = $region13
    $region12: #{lstm_forward.4} parent=1 // pred_region
      %s38 = ssub.s32 16, 16
      %39 = vsyncadd [#allocation6], %s38
      %s41 = sshll.u32 [#allocation7], 4
      %s42 = int_to_ptr.vmem [resolvable:$true] %s41
      %44 = dma.hbm_to_vmem [thread:$0]  %s2, 16, %s42, [#allocation6]
    $region13: #{lstm_forward.4} parent=1 // pred_fallthru
      _
    // Predicated region
    $region14: #{lstm_forward.4} parent=1 // pred_check
      _
    $region15: #{lstm_forward.4} parent=1 // pred_check_branch
      %46 = sbr.rel (0) target = $region17
    $region16: #{lstm_forward.4} parent=1 // pred_region
      %47 = dma.done [#allocation3], 1024
    $region17: #{lstm_forward.4} parent=1 // pred_fallthru
      _
    // Predicated region
    $region18: #{lstm_forward.4} parent=1 // pred_check
      _
    $region19: #{lstm_forward.4} parent=1 // pred_check_branch
      %49 = sbr.rel (0) target = $region21
    $region20: #{lstm_forward.4} parent=1 // pred_region
      %50 = dma.done [#allocation6], 128
    $region21: #{lstm_forward.4} parent=1 // pred_fallthru
      _
    // Predicated region
    $region22: #{lstm_forward.4} parent=1 // pred_check
      _
    $region23: #{lstm_forward.4} parent=1 // pred_check_branch
      %52 = sbr.rel (0) target = $region25
    $region24: #{lstm_forward.4} parent=1 // pred_region
      %53 = dma.done [#allocation6], 16
    $region25: #{lstm_forward.4} parent=1 // pred_fallthru
      _
    %v55 = vld [vmem:[#allocation2] sm:$0xff]
    %v56 = vld [vmem:[#allocation2 + $0x8] sm:$0xff]
    %v57 = vld [vmem:[#allocation2 + $0x10] sm:$0xff]
    %v58 = vld [vmem:[#allocation2 + $0x18] sm:$0xff]
    %v59 = vld [vmem:[#allocation2 + $0x20] sm:$0xff]
    %v60 = vld [vmem:[#allocation2 + $0x28] sm:$0xff]
    %v61 = vld [vmem:[#allocation2 + $0x30] sm:$0xff]
    %v62 = vld [vmem:[#allocation2 + $0x38] sm:$0xff]
    %v63 = vpack.c.bf16 %v56, %v55
    %v64 = vpack.c.bf16 %v58, %v57
    %v65 = vpack.c.bf16 %v60, %v59
    %v66 = vpack.c.bf16 %v62, %v61
    %v67 = vld [vmem:[#allocation5] sm:$0xf]
    %v68 = vld [vmem:[#allocation5 + $0x4] sm:$0xf]
    %v69 = vld [vmem:[#allocation7] sm:$0x1]
    %v71 = vlaneseq
    %v72 = vshrl.u32 %v71, 7
    %v73 = vsub.s32 0, %v72
    %v74 = vrot.slane %v69, %v73
    %v78 = vunpack.c.l.b16 %v67
    %v79 = vunpack.c.l.b16 %v68
    %v80 = vpack.c.b16 %v79, %v78
    %vm82 = vcmask 130048
    %v84 = vsel %vm82, %v63, 0
    %v87 = vsel %vm82, %v64, 0
    %v90 = vsel %vm82, %v65, 0
    %v93 = vsel %vm82, %v66, 0
    %95 = vmatprep.subr.bf16.mxu0 0
    %96 = vmatpush1.bf16.msra.mxu0 %v80
    %97 = vmatprep.subr.bf16.mxu0 0
    %98 = vmatpush1.bf16.msra.mxu0 0
    %99 = vmatprep.subr.bf16.mxu0 0
    %100 = vmatpush1.bf16.msra.mxu0 0
    %101 = vmatprep.subr.bf16.mxu0 0
    %102 = vmatpush1.bf16.msra.mxu0 0
    %103 = vmatprep.subr.bf16.mxu0 0
    %104 = vmatpush1.bf16.msra.mxu0 0
    %105 = vmatprep.subr.bf16.mxu0 0
    %106 = vmatpush1.bf16.msra.mxu0 0
    %107 = vmatprep.subr.bf16.mxu0 0
    %108 = vmatpush1.bf16.msra.mxu0 0
    %109 = vmatprep.subr.bf16.mxu0 0
    %110 = vmatpush1.bf16.msra.mxu0 0
    %111 = vmatprep.subr.bf16.mxu0 0
    %112 = vmatpush1.bf16.msra.mxu0 0
    %113 = vmatprep.subr.bf16.mxu0 0
    %114 = vmatpush1.bf16.msra.mxu0 0
    %115 = vmatprep.subr.bf16.mxu0 0
    %116 = vmatpush1.bf16.msra.mxu0 0
    %117 = vmatprep.subr.bf16.mxu0 0
    %118 = vmatpush1.bf16.msra.mxu0 0
    %119 = vmatprep.subr.bf16.mxu0 0
    %120 = vmatpush1.bf16.msra.mxu0 0
    %121 = vmatprep.subr.bf16.mxu0 0
    %122 = vmatpush1.bf16.msra.mxu0 0
    %123 = vmatprep.subr.bf16.mxu0 0
    %124 = vmatpush1.bf16.msra.mxu0 0
    %125 = vmatprep.subr.bf16.mxu0 0
    %126 = vmatpush1.bf16.msra.mxu0 0
    %127 = vmatprep.mubr.bf16.mxu0 0
    %128 = vmatmul.mubr.bf16.gmra.mrb[0].mxu0 %v84
    %v129 = vpop.f32.mrb[0].mxu0
    %v130 = vadd.f32 %v74, %v129
    %v131 = vpop.f32.mrb[0].mxu0
    %v132 = vpop.f32.mrb[0].mxu0
    %v133 = vadd.f32 %v74, %v132
    %v134 = vpop.f32.mrb[0].mxu0
    %135 = vmatprep.mubr.bf16.mxu0 0
    %136 = vmatmul.mubr.bf16.gmra.mrb[0].mxu0 %v87
    %v137 = vpop.f32.mrb[0].mxu0
    %v138 = vadd.f32 %v74, %v137
    %v139 = vpop.f32.mrb[0].mxu0
    %v140 = vpop.f32.mrb[0].mxu0
    %v141 = vadd.f32 %v74, %v140
    %v142 = vpop.f32.mrb[0].mxu0
    %143 = vmatprep.mubr.bf16.mxu0 0
    %144 = vmatmul.mubr.bf16.gmra.mrb[0].mxu0 %v90
    %v145 = vpop.f32.mrb[0].mxu0
    %v146 = vadd.f32 %v74, %v145
    %v147 = vpop.f32.mrb[0].mxu0
    %v148 = vpop.f32.mrb[0].mxu0
    %v149 = vadd.f32 %v74, %v148
    %v150 = vpop.f32.mrb[0].mxu0
    %151 = vmatprep.mubr.bf16.mxu0 0
    %152 = vmatmul.mubr.bf16.gmra.mrb[0].mxu0 %v93
    %v153 = vpop.f32.mrb[0].mxu0
    %v154 = vadd.f32 %v74, %v153
    %v155 = vpop.f32.mrb[0].mxu0
    %v156 = vpop.f32.mrb[0].mxu0
    %v157 = vadd.f32 %v74, %v156
    %v158 = vpop.f32.mrb[0].mxu0
    %159 = vdwg.mxu0
    %v160 = vpack.c.bf16 %v133, %v130
    %v161 = vpack.c.bf16 %v141, %v138
    %v162 = vpack.c.bf16 %v149, %v146
    %v163 = vpack.c.bf16 %v157, %v154
    %v168 = vunpack.c.l.b16 %v160
    %v169 = vunpack.c.h.b16 %v160
    %v170 = vunpack.c.l.b16 %v161
    %v171 = vunpack.c.h.b16 %v161
    %v172 = vunpack.c.l.b16 %v162
    %v173 = vunpack.c.h.b16 %v162
    %v174 = vunpack.c.l.b16 %v163
    %v175 = vunpack.c.h.b16 %v163
    %v176 = vpack.c.b16 %v168, %v168
    %v177 = vpack.c.b16 %v169, %v169
    %v178 = vpack.c.b16 %v170, %v170
    %v179 = vpack.c.b16 %v171, %v171
    %v180 = vpack.c.b16 %v172, %v172
    %v181 = vpack.c.b16 %v173, %v173
    %v182 = vpack.c.b16 %v174, %v174
    %v183 = vpack.c.b16 %v175, %v175
    %vm192 = vcmask 257024
    %193 = vst.msk [vmem:[#allocation8] sm:$0xf] %vm192, %v176
    %194 = vst.msk [vmem:[#allocation8 + $0x4] sm:$0xf] %vm192, %v177
    %195 = vst.msk [vmem:[#allocation8 + $0x8] sm:$0xf] %vm192, %v178
    %196 = vst.msk [vmem:[#allocation8 + $0xc] sm:$0xf] %vm192, %v179
    %197 = vst.msk [vmem:[#allocation8 + $0x10] sm:$0xf] %vm192, %v180
    %198 = vst.msk [vmem:[#allocation8 + $0x14] sm:$0xf] %vm192, %v181
    %199 = vst.msk [vmem:[#allocation8 + $0x18] sm:$0xf] %vm192, %v182
    %200 = vst.msk [vmem:[#allocation8 + $0x1c] sm:$0xf] %vm192, %v183
    // Predicated region
    $region26: #{lstm_forward.4} parent=1 // pred_check
      _
    $region27: #{lstm_forward.4} parent=1 // pred_check_branch
      %202 = sbr.rel (0) target = $region29
    $region28: #{lstm_forward.4} parent=1 // pred_region
      %s204 = ssub.s32 512, 512
      %205 = vsyncadd [#allocation4], %s204
      %s206 = sshll.u32 [#allocation8], 4
      %s207 = int_to_ptr.vmem [resolvable:$true] %s206
      %212 = dma.vmem_to_hbm [thread:$0]  %s207, 512, %s3, [#allocation4], 64, 64, 4
    $region29: #{lstm_forward.4} parent=1 // pred_fallthru
      _
    // Predicated region
    $region30: #{lstm_forward.4} parent=1 // pred_check
      _
    $region31: #{lstm_forward.4} parent=1 // pred_check_branch
      %214 = sbr.rel (0) target = $region33
    $region32: #{lstm_forward.4} parent=1 // pred_region
      %215 = dma.done [#allocation4], 512
    $region33: #{lstm_forward.4} parent=1 // pred_fallthru
      _
    %216 = vsyncpa [#allocation3], 1
    %217 = vsyncpa [#allocation6], 1
    %218 = vsyncpa [#allocation4], 1

// kernel: lstm_forward.7
$region0: #{lstm_forward.7}
  #allocation0 [shape = 'u32[]', space=smem, size = 0x4, offset = 0x4, fixed_abs, tag = 'smem constant byte address 0x4 - core index']
  #allocation1 [shape = 'u32[144,128]{1,0:T(1,128)}', space=vmem, size = 0x12000, scoped, tag = 'internal scratch']
  %s0 = inlined_call_operand.hbm [shape: bf16[64,32], index: 0, kind: input, shape index: {}]
  %s1 = inlined_call_operand.hbm [shape: bf16[32,48], index: 1, kind: input, shape index: {}]
  %s2 = inlined_call_operand.hbm [shape: f32[1,48], index: 2, kind: input, shape index: {}]
  %s3 = inlined_call_operand.hbm [shape: f32[64,48], index: 3, kind: output, shape index: {}]
  %s4 = sld [smem:[#allocation0]]
  $region34: #{lstm_forward.7} parent=0
    _
  %s6 = ssub.s32 1, %s4
  %s7 = scalar_select 0, %s6, %s4
  $region1: #{lstm_forward.7} parent=0
    #allocation2 [shape = 'u8[16384]{0}', space=vmem, size = 0x4000, scoped, tag = 'input window, operand 0, single buffered']
    #allocation3 [shape = 's32[1]{0}', space=sflag, size = 0x4, scoped, tag = 'scoped memory for lstm_forward.7']
    #allocation4 [shape = 's32[1]{0}', space=sflag, size = 0x4, scoped, tag = 'scoped memory for lstm_forward.7']
    #allocation5 [shape = 'u8[8192]{0}', space=vmem, size = 0x2000, scoped, tag = 'input window, operand 1, single buffered']
    #allocation6 [shape = 's32[1]{0}', space=sflag, size = 0x4, scoped, tag = 'scoped memory for lstm_forward.7']
    #allocation7 [shape = 'u8[512]{0}', space=vmem, size = 0x400, scoped, tag = 'input window, operand 2, single buffered']
    #allocation8 [shape = 'u8[32768]{0}', space=vmem, size = 0x8000, scoped, tag = 'output window, operand 0, single buffered']
    %8 = vsyncpa [#allocation3], 0
    %9 = vsyncpa [#allocation6], 0
    %10 = vsyncpa [#allocation4], 0
    // Predicated region
    $region2: #{lstm_forward.7} parent=1 // pred_check
      _
    $region3: #{lstm_forward.7} parent=1 // pred_check_branch
      %12 = sbr.rel (0) target = $region5
    $region4: #{lstm_forward.7} parent=1 // pred_region
      %s14 = ssub.s32 512, 512
      %15 = vsyncadd [#allocation3], %s14
      %s16 = sshll.u32 [#allocation2], 4
      %s17 = int_to_ptr.vmem [resolvable:$true] %s16
      %22 = dma.hbm_to_vmem [thread:$0]  %s0, 512, %s17, [#allocation3], 64, 64, 4
    $region5: #{lstm_forward.7} parent=1 // pred_fallthru
      _
    // Predicated region
    $region6: #{lstm_forward.7} parent=1 // pred_check
      _
    $region7: #{lstm_forward.7} parent=1 // pred_check_branch
      %24 = sbr.rel (0) target = $region9
    $region8: #{lstm_forward.7} parent=1 // pred_region
      %s26 = ssub.s32 256, 256
      %27 = vsyncadd [#allocation6], %s26
      %s28 = sshll.u32 [#allocation5], 4
      %s29 = int_to_ptr.vmem [resolvable:$true] %s28
      %34 = dma.hbm_to_vmem [thread:$0]  %s1, 256, %s29, [#allocation6], 64, 64, 4
    $region9: #{lstm_forward.7} parent=1 // pred_fallthru
      _
    // Predicated region
    $region10: #{lstm_forward.7} parent=1 // pred_check
      _
    $region11: #{lstm_forward.7} parent=1 // pred_check_branch
      %36 = sbr.rel (0) target = $region13
    $region12: #{lstm_forward.7} parent=1 // pred_region
      %s38 = ssub.s32 16, 16
      %39 = vsyncadd [#allocation6], %s38
      %s41 = sshll.u32 [#allocation7], 4
      %s42 = int_to_ptr.vmem [resolvable:$true] %s41
      %44 = dma.hbm_to_vmem [thread:$0]  %s2, 16, %s42, [#allocation6]
    $region13: #{lstm_forward.7} parent=1 // pred_fallthru
      _
    // Predicated region
    $region14: #{lstm_forward.7} parent=1 // pred_check
      _
    $region15: #{lstm_forward.7} parent=1 // pred_check_branch
      %46 = sbr.rel (0) target = $region17
    $region16: #{lstm_forward.7} parent=1 // pred_region
      %47 = dma.done [#allocation3], 512
    $region17: #{lstm_forward.7} parent=1 // pred_fallthru
      _
    // Predicated region
    $region18: #{lstm_forward.7} parent=1 // pred_check
      _
    $region19: #{lstm_forward.7} parent=1 // pred_check_branch
      %49 = sbr.rel (0) target = $region21
    $region20: #{lstm_forward.7} parent=1 // pred_region
      %50 = dma.done [#allocation6], 256
    $region21: #{lstm_forward.7} parent=1 // pred_fallthru
      _
    // Predicated region
    $region22: #{lstm_forward.7} parent=1 // pred_check
      _
    $region23: #{lstm_forward.7} parent=1 // pred_check_branch
      %52 = sbr.rel (0) target = $region25
    $region24: #{lstm_forward.7} parent=1 // pred_region
      %53 = dma.done [#allocation6], 16
    $region25: #{lstm_forward.7} parent=1 // pred_fallthru
      _
    %v55 = vld [vmem:[#allocation2] sm:$0xf]
    %v56 = vld [vmem:[#allocation2 + $0x4] sm:$0xf]
    %v57 = vld [vmem:[#allocation2 + $0x8] sm:$0xf]
    %v58 = vld [vmem:[#allocation2 + $0xc] sm:$0xf]
    %v59 = vld [vmem:[#allocation2 + $0x10] sm:$0xf]
    %v60 = vld [vmem:[#allocation2 + $0x14] sm:$0xf]
    %v61 = vld [vmem:[#allocation2 + $0x18] sm:$0xf]
    %v62 = vld [vmem:[#allocation2 + $0x1c] sm:$0xf]
    %v63 = vld [vmem:[#allocation5] sm:$0xf]
    %v64 = vld [vmem:[#allocation5 + $0x4] sm:$0xf]
    %v65 = vld [vmem:[#allocation5 + $0x8] sm:$0xf]
    %v66 = vld [vmem:[#allocation5 + $0xc] sm:$0xf]
    %v67 = vld [vmem:[#allocation7] sm:$0x1]
    %v69 = vlaneseq
    %v70 = vshrl.u32 %v69, 7
    %v71 = vsub.s32 0, %v70
    %v72 = vrot.slane %v67, %v71
    %v82 = vunpack.c.l.b16 %v55
    %v83 = vunpack.c.l.b16 %v56
    %v84 = vunpack.c.l.b16 %v57
    %v85 = vunpack.c.l.b16 %v58
    %v86 = vunpack.c.l.b16 %v59
    %v87 = vunpack.c.l.b16 %v60
    %v88 = vunpack.c.l.b16 %v61
    %v89 = vunpack.c.l.b16 %v62
    %v90 = vpack.c.b16 %v83, %v82
    %v91 = vpack.c.b16 %v85, %v84
    %v92 = vpack.c.b16 %v87, %v86
    %v93 = vpack.c.b16 %v89, %v88
    %v98 = vunpack.c.l.b16 %v63
    %v99 = vunpack.c.l.b16 %v64
    %v100 = vunpack.c.l.b16 %v65
    %v101 = vunpack.c.l.b16 %v66
    %v102 = vpack.c.b16 %v99, %v98
    %v103 = vpack.c.b16 %v101, %v100
    %vm106 = vcmask 261120
    %v108 = vsel %vm106, %v90, 0
    %v111 = vsel %vm106, %v91, 0
    %v114 = vsel %vm106, %v92, 0
    %v117 = vsel %vm106, %v93, 0
    %119 = vmatprep.subr.bf16.mxu0 0
    %120 = vmatpush1.bf16.msra.mxu0 %v102
    %121 = vmatprep.subr.bf16.mxu0 0
    %122 = vmatpush1.bf16.msra.mxu0 %v103
    %123 = vmatprep.subr.bf16.mxu0 0
    %124 = vmatpush1.bf16.msra.mxu0 0
    %125 = vmatprep.subr.bf16.mxu0 0
    %126 = vmatpush1.bf16.msra.mxu0 0
    %127 = vmatprep.subr.bf16.mxu0 0
    %128 = vmatpush1.bf16.msra.mxu0 0
    %129 = vmatprep.subr.bf16.mxu0 0
    %130 = vmatpush1.bf16.msra.mxu0 0
    %131 = vmatprep.subr.bf16.mxu0 0
    %132 = vmatpush1.bf16.msra.mxu0 0
    %133 = vmatprep.subr.bf16.mxu0 0
    %134 = vmatpush1.bf16.msra.mxu0 0
    %135 = vmatprep.subr.bf16.mxu0 0
    %136 = vmatpush1.bf16.msra.mxu0 0
    %137 = vmatprep.subr.bf16.mxu0 0
    %138 = vmatpush1.bf16.msra.mxu0 0
    %139 = vmatprep.subr.bf16.mxu0 0
    %140 = vmatpush1.bf16.msra.mxu0 0
    %141 = vmatprep.subr.bf16.mxu0 0
    %142 = vmatpush1.bf16.msra.mxu0 0
    %143 = vmatprep.subr.bf16.mxu0 0
    %144 = vmatpush1.bf16.msra.mxu0 0
    %145 = vmatprep.subr.bf16.mxu0 0
    %146 = vmatpush1.bf16.msra.mxu0 0
    %147 = vmatprep.subr.bf16.mxu0 0
    %148 = vmatpush1.bf16.msra.mxu0 0
    %149 = vmatprep.subr.bf16.mxu0 0
    %150 = vmatpush1.bf16.msra.mxu0 0
    %151 = vmatprep.mubr.bf16.mxu0 0
    %152 = vmatmul.mubr.bf16.gmra.mrb[0].mxu0 %v108
    %v153 = vpop.f32.mrb[0].mxu0
    %v154 = vadd.f32 %v72, %v153
    %v155 = vpop.f32.mrb[0].mxu0
    %v156 = vpop.f32.mrb[0].mxu0
    %v157 = vadd.f32 %v72, %v156
    %v158 = vpop.f32.mrb[0].mxu0
    %159 = vmatprep.mubr.bf16.mxu0 0
    %160 = vmatmul.mubr.bf16.gmra.mrb[0].mxu0 %v111
    %v161 = vpop.f32.mrb[0].mxu0
    %v162 = vadd.f32 %v72, %v161
    %v163 = vpop.f32.mrb[0].mxu0
    %v164 = vpop.f32.mrb[0].mxu0
    %v165 = vadd.f32 %v72, %v164
    %v166 = vpop.f32.mrb[0].mxu0
    %167 = vmatprep.mubr.bf16.mxu0 0
    %168 = vmatmul.mubr.bf16.gmra.mrb[0].mxu0 %v114
    %v169 = vpop.f32.mrb[0].mxu0
    %v170 = vadd.f32 %v72, %v169
    %v171 = vpop.f32.mrb[0].mxu0
    %v172 = vpop.f32.mrb[0].mxu0
    %v173 = vadd.f32 %v72, %v172
    %v174 = vpop.f32.mrb[0].mxu0
    %175 = vmatprep.mubr.bf16.mxu0 0
    %176 = vmatmul.mubr.bf16.gmra.mrb[0].mxu0 %v117
    %v177 = vpop.f32.mrb[0].mxu0
    %v178 = vadd.f32 %v72, %v177
    %v179 = vpop.f32.mrb[0].mxu0
    %v180 = vpop.f32.mrb[0].mxu0
    %v181 = vadd.f32 %v72, %v180
    %v182 = vpop.f32.mrb[0].mxu0
    %183 = vdwg.mxu0
    %vm184 = vcmask 392192
    %v185 = vsel %vm184, %v154, -inf
    %186 = vmax.xlane.f32.xlu0 %v185
    %v187 = vpop.xlane.xlu0 %186
    %v188 = vsel %vm184, %v157, -inf
    %189 = vmax.xlane.f32.xlu0 %v188
    %v190 = vpop.xlane.xlu0 %189
    %v191 = vsel %vm184, %v162, -inf
    %192 = vmax.xlane.f32.xlu0 %v191
    %v193 = vpop.xlane.xlu0 %192
    %v194 = vsel %vm184, %v165, -inf
    %195 = vmax.xlane.f32.xlu0 %v194
    %v196 = vpop.xlane.xlu0 %195
    %v197 = vsel %vm184, %v170, -inf
    %198 = vmax.xlane.f32.xlu0 %v197
    %v199 = vpop.xlane.xlu0 %198
    %v200 = vsel %vm184, %v173, -inf
    %201 = vmax.xlane.f32.xlu0 %v200
    %v202 = vpop.xlane.xlu0 %201
    %v203 = vsel %vm184, %v178, -inf
    %204 = vmax.xlane.f32.xlu0 %v203
    %v205 = vpop.xlane.xlu0 %204
    %v206 = vsel %vm184, %v181, -inf
    %207 = vmax.xlane.f32.xlu0 %v206
    %v208 = vpop.xlane.xlu0 %207
    %v209 = vsub.f32 %v154, %v187
    %v210 = vsub.f32 %v157, %v190
    %v211 = vsub.f32 %v162, %v193
    %v212 = vsub.f32 %v165, %v196
    %v213 = vsub.f32 %v170, %v199
    %v214 = vsub.f32 %v173, %v202
    %v215 = vsub.f32 %v178, %v205
    %v216 = vsub.f32 %v181, %v208
    %v217 = vmul.f32 %v209, 1.442695
    %v218 = vpow.pop %v217
    %v219 = vmul.f32 %v210, 1.442695
    %v220 = vpow.pop %v219
    %v221 = vmul.f32 %v211, 1.442695
    %v222 = vpow.pop %v221
    %v223 = vmul.f32 %v212, 1.442695
    %v224 = vpow.pop %v223
    %v225 = vmul.f32 %v213, 1.442695
    %v226 = vpow.pop %v225
    %v227 = vmul.f32 %v214, 1.442695
    %v228 = vpow.pop %v227
    %v229 = vmul.f32 %v215, 1.442695
    %v230 = vpow.pop %v229
    %v231 = vmul.f32 %v216, 1.442695
    %v232 = vpow.pop %v231
    %v233 = vsel %vm184, %v218, 0.0
    %234 = vadd.xlane.f32.xlu0 %v233
    %v235 = vpop.xlane.xlu0 %234
    %v236 = vsel %vm184, %v220, 0.0
    %237 = vadd.xlane.f32.xlu0 %v236
    %v238 = vpop.xlane.xlu0 %237
    %v239 = vsel %vm184, %v222, 0.0
    %240 = vadd.xlane.f32.xlu0 %v239
    %v241 = vpop.xlane.xlu0 %240
    %v242 = vsel %vm184, %v224, 0.0
    %243 = vadd.xlane.f32.xlu0 %v242
    %v244 = vpop.xlane.xlu0 %243
    %v245 = vsel %vm184, %v226, 0.0
    %246 = vadd.xlane.f32.xlu0 %v245
    %v247 = vpop.xlane.xlu0 %246
    %v248 = vsel %vm184, %v228, 0.0
    %249 = vadd.xlane.f32.xlu0 %v248
    %v250 = vpop.xlane.xlu0 %249
    %v251 = vsel %vm184, %v230, 0.0
    %252 = vadd.xlane.f32.xlu0 %v251
    %v253 = vpop.xlane.xlu0 %252
    %v254 = vsel %vm184, %v232, 0.0
    %255 = vadd.xlane.f32.xlu0 %v254
    %v256 = vpop.xlane.xlu0 %255
    %v257 = vlog2.pop %v235
    %v258 = vmul.f32 %v257, 0.6931472
    %v259 = vlog2.pop %v238
    %v260 = vmul.f32 %v259, 0.6931472
    %v261 = vlog2.pop %v241
    %v262 = vmul.f32 %v261, 0.6931472
    %v263 = vlog2.pop %v244
    %v264 = vmul.f32 %v263, 0.6931472
    %v265 = vlog2.pop %v247
    %v266 = vmul.f32 %v265, 0.6931472
    %v267 = vlog2.pop %v250
    %v268 = vmul.f32 %v267, 0.6931472
    %v269 = vlog2.pop %v253
    %v270 = vmul.f32 %v269, 0.6931472
    %v271 = vlog2.pop %v256
    %v272 = vmul.f32 %v271, 0.6931472
    %v273 = vadd.f32 %v187, %v258
    %v274 = vadd.f32 %v190, %v260
    %v275 = vadd.f32 %v193, %v262
    %v276 = vadd.f32 %v196, %v264
    %v277 = vadd.f32 %v199, %v266
    %v278 = vadd.f32 %v202, %v268
    %v279 = vadd.f32 %v205, %v270
    %v280 = vadd.f32 %v208, %v272
    %v281 = vsub.f32 %v154, %v273
    %v282 = vsub.f32 %v157, %v274
    %v283 = vsub.f32 %v162, %v275
    %v284 = vsub.f32 %v165, %v276
    %v285 = vsub.f32 %v170, %v277
    %v286 = vsub.f32 %v173, %v278
    %v287 = vsub.f32 %v178, %v279
    %v288 = vsub.f32 %v181, %v280
    %289 = vst.msk [vmem:[#allocation8] sm:$0xff] %vm184, %v281
    %290 = vst.msk [vmem:[#allocation8 + $0x8] sm:$0xff] %vm184, %v282
    %291 = vst.msk [vmem:[#allocation8 + $0x10] sm:$0xff] %vm184, %v283
    %292 = vst.msk [vmem:[#allocation8 + $0x18] sm:$0xff] %vm184, %v284
    %293 = vst.msk [vmem:[#allocation8 + $0x20] sm:$0xff] %vm184, %v285
    %294 = vst.msk [vmem:[#allocation8 + $0x28] sm:$0xff] %vm184, %v286
    %295 = vst.msk [vmem:[#allocation8 + $0x30] sm:$0xff] %vm184, %v287
    %296 = vst.msk [vmem:[#allocation8 + $0x38] sm:$0xff] %vm184, %v288
    // Predicated region
    $region26: #{lstm_forward.7} parent=1 // pred_check
      _
    $region27: #{lstm_forward.7} parent=1 // pred_check_branch
      %298 = sbr.rel (0) target = $region29
    $region28: #{lstm_forward.7} parent=1 // pred_region
      %s300 = ssub.s32 1024, 1024
      %301 = vsyncadd [#allocation4], %s300
      %s302 = sshll.u32 [#allocation8], 4
      %s303 = int_to_ptr.vmem [resolvable:$true] %s302
      %308 = dma.vmem_to_hbm [thread:$0]  %s303, 1024, %s3, [#allocation4], 128, 128, 8
    $region29: #{lstm_forward.7} parent=1 // pred_fallthru
      _
    // Predicated region
    $region30: #{lstm_forward.7} parent=1 // pred_check
      _
    $region31: #{lstm_forward.7} parent=1 // pred_check_branch
      %310 = sbr.rel (0) target = $region33
    $region32: #{lstm_forward.7} parent=1 // pred_region
      %311 = dma.done [#allocation4], 1024
    $region33: #{lstm_forward.7} parent=1 // pred_fallthru
      _
    %312 = vsyncpa [#allocation3], 1
    %313 = vsyncpa [#allocation6], 1
    %314 = vsyncpa [#allocation4], 1

// kernel: lstm_forward.5
$region0: #{lstm_forward.5}
  #allocation0 [shape = 'u32[]', space=smem, size = 0x4, offset = 0x4, fixed_abs, tag = 'smem constant byte address 0x4 - core index']
  #allocation1 [shape = 'u32[144,128]{1,0:T(1,128)}', space=vmem, size = 0x12000, scoped, tag = 'internal scratch']
  #allocation2 [shape = 'f32[8,8,128]{2,1,0:T(8,128)}', space=vmem, size = 0x8000, scoped, tag = 'scratch operand']
  %s0 = inlined_call_operand.hbm [shape: bf16[8,8,32], index: 0, kind: input, shape index: {}]
  %s1 = inlined_call_operand.hbm [shape: bf16[32,128], index: 1, kind: input, shape index: {}]
  %s2 = inlined_call_operand.hbm [shape: bf16[32,128], index: 2, kind: input, shape index: {}]
  %s3 = inlined_call_operand.hbm [shape: f32[1,128], index: 3, kind: input, shape index: {}]
  %s4 = inlined_call_operand.hbm [shape: f32[8,32], index: 4, kind: input, shape index: {}]
  %s5 = inlined_call_operand.hbm [shape: f32[8,32], index: 5, kind: input, shape index: {}]
  %s6 = inlined_call_operand.hbm [shape: bf16[8,8,32], index: 6, kind: output, shape index: {0}]
  %s7 = inlined_call_operand.hbm [shape: f32[8,32], index: 7, kind: output, shape index: {1}]
  %s8 = inlined_call_operand.hbm [shape: f32[8,32], index: 8, kind: output, shape index: {2}]
  %9 = xla_tuple %s6, %s7, %s8
  %s10 = sld [smem:[#allocation0]]
  $region78: #{lstm_forward.5} parent=0
    _
  %s12 = ssub.s32 1, %s10
  %s13 = scalar_select 0, %s12, %s10
  $region1: #{lstm_forward.5} parent=0
    #allocation3 [shape = 'u8[16384]{0}', space=vmem, size = 0x4000, scoped, tag = 'input window, operand 0, single buffered']
    #allocation4 [shape = 's32[1]{0}', space=sflag, size = 0x4, scoped, tag = 'scoped memory for lstm_forward.5']
    #allocation5 [shape = 's32[1]{0}', space=sflag, size = 0x4, scoped, tag = 'scoped memory for lstm_forward.5']
    #allocation6 [shape = 'u8[8192]{0}', space=vmem, size = 0x2000, scoped, tag = 'input window, operand 1, single buffered']
    #allocation7 [shape = 's32[1]{0}', space=sflag, size = 0x4, scoped, tag = 'scoped memory for lstm_forward.5']
    #allocation8 [shape = 'u8[8192]{0}', space=vmem, size = 0x2000, scoped, tag = 'input window, operand 2, single buffered']
    #allocation9 [shape = 'u8[512]{0}', space=vmem, size = 0x400, scoped, tag = 'input window, operand 3, single buffered']
    #allocation10 [shape = 's32[1]{0}', space=sflag, size = 0x4, scoped, tag = 'scoped memory for lstm_forward.5']
    #allocation11 [shape = 'u8[4096]{0}', space=vmem, size = 0x1000, scoped, tag = 'input window, operand 4, single buffered']
    #allocation12 [shape = 'u8[4096]{0}', space=vmem, size = 0x1000, scoped, tag = 'input window, operand 5, single buffered']
    #allocation13 [shape = 's32[1]{0}', space=sflag, size = 0x4, scoped, tag = 'scoped memory for lstm_forward.5']
    #allocation14 [shape = 'u8[16384]{0}', space=vmem, size = 0x4000, scoped, tag = 'output window, operand 0, single buffered']
    #allocation15 [shape = 'u8[4096]{0}', space=vmem, size = 0x1000, scoped, tag = 'output window, operand 1, single buffered']
    #allocation16 [shape = 's32[1]{0}', space=sflag, size = 0x4, scoped, tag = 'scoped memory for lstm_forward.5']
    #allocation17 [shape = 'u8[4096]{0}', space=vmem, size = 0x1000, scoped, tag = 'output window, operand 2, single buffered']
    %14 = vsyncpa [#allocation4], 0
    %15 = vsyncpa [#allocation7], 0
    %16 = vsyncpa [#allocation10], 0
    %17 = vsyncpa [#allocation13], 0
    %18 = vsyncpa [#allocation5], 0
    %19 = vsyncpa [#allocation16], 0
    // Predicated region
    $region2: #{lstm_forward.5} parent=1 // pred_check
      _
    $region3: #{lstm_forward.5} parent=1 // pred_check_branch
      %21 = sbr.rel (0) target = $region5
    $region4: #{lstm_forward.5} parent=1 // pred_region
      %s23 = ssub.s32 512, 512
      %24 = vsyncadd [#allocation4], %s23
      %s25 = sshll.u32 [#allocation3], 4
      %s26 = int_to_ptr.vmem [resolvable:$true] %s25
      %31 = dma.hbm_to_vmem [thread:$0]  %s0, 512, %s26, [#allocation4], 64, 64, 4
    $region5: #{lstm_forward.5} parent=1 // pred_fallthru
      _
    // Predicated region
    $region6: #{lstm_forward.5} parent=1 // pred_check
      _
    $region7: #{lstm_forward.5} parent=1 // pred_check_branch
      %33 = sbr.rel (0) target = $region9
    $region8: #{lstm_forward.5} parent=1 // pred_region
      %s35 = ssub.s32 256, 256
      %36 = vsyncadd [#allocation7], %s35
      %s37 = sshll.u32 [#allocation6], 4
      %s38 = int_to_ptr.vmem [resolvable:$true] %s37
      %43 = dma.hbm_to_vmem [thread:$0]  %s1, 256, %s38, [#allocation7], 64, 64, 4
    $region9: #{lstm_forward.5} parent=1 // pred_fallthru
      _
    // Predicated region
    $region10: #{lstm_forward.5} parent=1 // pred_check
      _
    $region11: #{lstm_forward.5} parent=1 // pred_check_branch
      %45 = sbr.rel (0) target = $region13
    $region12: #{lstm_forward.5} parent=1 // pred_region
      %s47 = ssub.s32 256, 256
      %48 = vsyncadd [#allocation7], %s47
      %s49 = sshll.u32 [#allocation8], 4
      %s50 = int_to_ptr.vmem [resolvable:$true] %s49
      %55 = dma.hbm_to_vmem [thread:$0]  %s2, 256, %s50, [#allocation7], 64, 64, 4
    $region13: #{lstm_forward.5} parent=1 // pred_fallthru
      _
    // Predicated region
    $region14: #{lstm_forward.5} parent=1 // pred_check
      _
    $region15: #{lstm_forward.5} parent=1 // pred_check_branch
      %57 = sbr.rel (0) target = $region17
    $region16: #{lstm_forward.5} parent=1 // pred_region
      %s59 = ssub.s32 16, 16
      %60 = vsyncadd [#allocation10], %s59
      %s62 = sshll.u32 [#allocation9], 4
      %s63 = int_to_ptr.vmem [resolvable:$true] %s62
      %65 = dma.hbm_to_vmem [thread:$0]  %s3, 16, %s63, [#allocation10]
    $region17: #{lstm_forward.5} parent=1 // pred_fallthru
      _
    // Predicated region
    $region18: #{lstm_forward.5} parent=1 // pred_check
      _
    $region19: #{lstm_forward.5} parent=1 // pred_check_branch
      %67 = sbr.rel (0) target = $region21
    $region20: #{lstm_forward.5} parent=1 // pred_region
      %s69 = ssub.s32 128, 128
      %70 = vsyncadd [#allocation10], %s69
      %s72 = sshll.u32 [#allocation11], 4
      %s73 = int_to_ptr.vmem [resolvable:$true] %s72
      %75 = dma.hbm_to_vmem [thread:$0]  %s4, 128, %s73, [#allocation10]
    $region21: #{lstm_forward.5} parent=1 // pred_fallthru
      _
    // Predicated region
    $region22: #{lstm_forward.5} parent=1 // pred_check
      _
    $region23: #{lstm_forward.5} parent=1 // pred_check_branch
      %77 = sbr.rel (0) target = $region25
    $region24: #{lstm_forward.5} parent=1 // pred_region
      %s79 = ssub.s32 128, 128
      %80 = vsyncadd [#allocation13], %s79
      %s82 = sshll.u32 [#allocation12], 4
      %s83 = int_to_ptr.vmem [resolvable:$true] %s82
      %85 = dma.hbm_to_vmem [thread:$0]  %s5, 128, %s83, [#allocation13]
    $region25: #{lstm_forward.5} parent=1 // pred_fallthru
      _
    // Predicated region
    $region26: #{lstm_forward.5} parent=1 // pred_check
      _
    $region27: #{lstm_forward.5} parent=1 // pred_check_branch
      %87 = sbr.rel (0) target = $region29
    $region28: #{lstm_forward.5} parent=1 // pred_region
      %88 = dma.done [#allocation4], 512
    $region29: #{lstm_forward.5} parent=1 // pred_fallthru
      _
    // Predicated region
    $region30: #{lstm_forward.5} parent=1 // pred_check
      _
    $region31: #{lstm_forward.5} parent=1 // pred_check_branch
      %90 = sbr.rel (0) target = $region33
    $region32: #{lstm_forward.5} parent=1 // pred_region
      %91 = dma.done [#allocation7], 256
    $region33: #{lstm_forward.5} parent=1 // pred_fallthru
      _
    // Predicated region
    $region34: #{lstm_forward.5} parent=1 // pred_check
      _
    $region35: #{lstm_forward.5} parent=1 // pred_check_branch
      %93 = sbr.rel (0) target = $region37
    $region36: #{lstm_forward.5} parent=1 // pred_region
      %94 = dma.done [#allocation7], 256
    $region37: #{lstm_forward.5} parent=1 // pred_fallthru
      _
    // Predicated region
    $region38: #{lstm_forward.5} parent=1 // pred_check
      _
    $region39: #{lstm_forward.5} parent=1 // pred_check_branch
      %96 = sbr.rel (0) target = $region41
    $region40: #{lstm_forward.5} parent=1 // pred_region
      %97 = dma.done [#allocation10], 16
    $region41: #{lstm_forward.5} parent=1 // pred_fallthru
      _
    // Predicated region
    $region42: #{lstm_forward.5} parent=1 // pred_check
      _
    $region43: #{lstm_forward.5} parent=1 // pred_check_branch
      %99 = sbr.rel (0) target = $region45
    $region44: #{lstm_forward.5} parent=1 // pred_region
      %100 = dma.done [#allocation10], 128
    $region45: #{lstm_forward.5} parent=1 // pred_fallthru
      _
    // Predicated region
    $region46: #{lstm_forward.5} parent=1 // pred_check
      _
    $region47: #{lstm_forward.5} parent=1 // pred_check_branch
      %102 = sbr.rel (0) target = $region49
    $region48: #{lstm_forward.5} parent=1 // pred_region
      %103 = dma.done [#allocation13], 128
    $region49: #{lstm_forward.5} parent=1 // pred_fallthru
      _
    %p105 = scmp.eq.s32.totalorder 0, 0
    // Predicated region
    $region50: #{lstm_forward.5} parent=1 // pred_check
      %p106 = pneg %p105
    $region51: #{lstm_forward.5} parent=1 // pred_check_branch
      %108 = sbr.rel (%p106) target = $region53
    $region52: #{lstm_forward.5} parent=1 // pred_region
      %v109 = vld [vmem:[#allocation11] sm:$0xff]
      %vm110 = vcmask 261120
      %111 = vst.msk [vmem:[#allocation15] sm:$0xff] %vm110, %v109
      %v112 = vld [vmem:[#allocation12] sm:$0xff]
      %113 = vst.msk [vmem:[#allocation17] sm:$0xff] %vm110, %v112
    $region53: #{lstm_forward.5} parent=1 // pred_fallthru
      _
    %v114 = vld [vmem:[#allocation3] sm:$0xf]
    %v115 = vld [vmem:[#allocation3 + $0x4] sm:$0xf]
    %v116 = vld [vmem:[#allocation3 + $0x8] sm:$0xf]
    %v117 = vld [vmem:[#allocation3 + $0xc] sm:$0xf]
    %v118 = vld [vmem:[#allocation3 + $0x10] sm:$0xf]
    %v119 = vld [vmem:[#allocation3 + $0x14] sm:$0xf]
    %v120 = vld [vmem:[#allocation3 + $0x18] sm:$0xf]
    %v121 = vld [vmem:[#allocation3 + $0x1c] sm:$0xf]
    %v122 = vld [vmem:[#allocation6] sm:$0xf]
    %v123 = vld [vmem:[#allocation6 + $0x4] sm:$0xf]
    %v124 = vld [vmem:[#allocation6 + $0x8] sm:$0xf]
    %v125 = vld [vmem:[#allocation6 + $0xc] sm:$0xf]
    %v126 = vld [vmem:[#allocation9] sm:$0x1]
    %v128 = vlaneseq
    %v129 = vshrl.u32 %v128, 7
    %v130 = vsub.s32 0, %v129
    %v131 = vrot.slane %v126, %v130
    %v141 = vunpack.c.l.b16 %v114
    %v142 = vunpack.c.l.b16 %v115
    %v143 = vunpack.c.l.b16 %v116
    %v144 = vunpack.c.l.b16 %v117
    %v145 = vunpack.c.l.b16 %v118
    %v146 = vunpack.c.l.b16 %v119
    %v147 = vunpack.c.l.b16 %v120
    %v148 = vunpack.c.l.b16 %v121
    %v149 = vpack.c.b16 %v142, %v141
    %v150 = vpack.c.b16 %v144, %v143
    %v151 = vpack.c.b16 %v146, %v145
    %v152 = vpack.c.b16 %v148, %v147
    %v157 = vunpack.c.l.b16 %v122
    %v158 = vunpack.c.l.b16 %v123
    %v159 = vunpack.c.l.b16 %v124
    %v160 = vunpack.c.l.b16 %v125
    %v161 = vpack.c.b16 %v158, %v157
    %v162 = vpack.c.b16 %v160, %v159
    %vm165 = vcmask 261120
    %v167 = vsel %vm165, %v149, 0
    %v170 = vsel %vm165, %v150, 0
    %v173 = vsel %vm165, %v151, 0
    %v176 = vsel %vm165, %v152, 0
    %178 = vmatprep.subr.bf16.mxu0 0
    %179 = vmatpush1.bf16.msra.mxu0 %v161
    %180 = vmatprep.subr.bf16.mxu0 0
    %181 = vmatpush1.bf16.msra.mxu0 %v162
    %182 = vmatprep.subr.bf16.mxu0 0
    %183 = vmatpush1.bf16.msra.mxu0 0
    %184 = vmatprep.subr.bf16.mxu0 0
    %185 = vmatpush1.bf16.msra.mxu0 0
    %186 = vmatprep.subr.bf16.mxu0 0
    %187 = vmatpush1.bf16.msra.mxu0 0
    %188 = vmatprep.subr.bf16.mxu0 0
    %189 = vmatpush1.bf16.msra.mxu0 0
    %190 = vmatprep.subr.bf16.mxu0 0
    %191 = vmatpush1.bf16.msra.mxu0 0
    %192 = vmatprep.subr.bf16.mxu0 0
    %193 = vmatpush1.bf16.msra.mxu0 0
    %194 = vmatprep.subr.bf16.mxu0 0
    %195 = vmatpush1.bf16.msra.mxu0 0
    %196 = vmatprep.subr.bf16.mxu0 0
    %197 = vmatpush1.bf16.msra.mxu0 0
    %198 = vmatprep.subr.bf16.mxu0 0
    %199 = vmatpush1.bf16.msra.mxu0 0
    %200 = vmatprep.subr.bf16.mxu0 0
    %201 = vmatpush1.bf16.msra.mxu0 0
    %202 = vmatprep.subr.bf16.mxu0 0
    %203 = vmatpush1.bf16.msra.mxu0 0
    %204 = vmatprep.subr.bf16.mxu0 0
    %205 = vmatpush1.bf16.msra.mxu0 0
    %206 = vmatprep.subr.bf16.mxu0 0
    %207 = vmatpush1.bf16.msra.mxu0 0
    %208 = vmatprep.subr.bf16.mxu0 0
    %209 = vmatpush1.bf16.msra.mxu0 0
    %210 = vmatprep.mubr.bf16.mxu0 0
    %211 = vmatmul.mubr.bf16.gmra.mrb[0].mxu0 %v167
    %v212 = vpop.f32.mrb[0].mxu0
    %v213 = vadd.f32 %v131, %v212
    %v214 = vpop.f32.mrb[0].mxu0
    %v215 = vpop.f32.mrb[0].mxu0
    %v216 = vadd.f32 %v131, %v215
    %v217 = vpop.f32.mrb[0].mxu0
    %218 = vmatprep.mubr.bf16.mxu0 0
    %219 = vmatmul.mubr.bf16.gmra.mrb[0].mxu0 %v170
    %v220 = vpop.f32.mrb[0].mxu0
    %v221 = vadd.f32 %v131, %v220
    %v222 = vpop.f32.mrb[0].mxu0
    %v223 = vpop.f32.mrb[0].mxu0
    %v224 = vadd.f32 %v131, %v223
    %v225 = vpop.f32.mrb[0].mxu0
    %226 = vmatprep.mubr.bf16.mxu0 0
    %227 = vmatmul.mubr.bf16.gmra.mrb[0].mxu0 %v173
    %v228 = vpop.f32.mrb[0].mxu0
    %v229 = vadd.f32 %v131, %v228
    %v230 = vpop.f32.mrb[0].mxu0
    %v231 = vpop.f32.mrb[0].mxu0
    %v232 = vadd.f32 %v131, %v231
    %v233 = vpop.f32.mrb[0].mxu0
    %234 = vmatprep.mubr.bf16.mxu0 0
    %235 = vmatmul.mubr.bf16.gmra.mrb[0].mxu0 %v176
    %v236 = vpop.f32.mrb[0].mxu0
    %v237 = vadd.f32 %v131, %v236
    %v238 = vpop.f32.mrb[0].mxu0
    %v239 = vpop.f32.mrb[0].mxu0
    %v240 = vadd.f32 %v131, %v239
    %v241 = vpop.f32.mrb[0].mxu0
    %242 = vdwg.mxu0
    %243 = vst [vmem:[#allocation2] sm:$0xff] %v213
    %244 = vst [vmem:[#allocation2 + $0x8] sm:$0xff] %v216
    %245 = vst [vmem:[#allocation2 + $0x10] sm:$0xff] %v221
    %246 = vst [vmem:[#allocation2 + $0x18] sm:$0xff] %v224
    %247 = vst [vmem:[#allocation2 + $0x20] sm:$0xff] %v229
    %248 = vst [vmem:[#allocation2 + $0x28] sm:$0xff] %v232
    %249 = vst [vmem:[#allocation2 + $0x30] sm:$0xff] %v237
    %250 = vst [vmem:[#allocation2 + $0x38] sm:$0xff] %v240
    %v251 = vld [vmem:[#allocation8] sm:$0xf]
    %v252 = vld [vmem:[#allocation8 + $0x4] sm:$0xf]
    %v253 = vld [vmem:[#allocation8 + $0x8] sm:$0xf]
    %v254 = vld [vmem:[#allocation8 + $0xc] sm:$0xf]
    %v255 = vld [vmem:[#allocation15] sm:$0xff]
    %v256 = vld [vmem:[#allocation17] sm:$0xff]
    %v257 = vld [vmem:[#allocation2] sm:$0xff]
    %v258 = vpack.c.bf16 %v255, %v255
    %v263 = vunpack.c.l.b16 %v251
    %v264 = vunpack.c.l.b16 %v252
    %v265 = vunpack.c.l.b16 %v253
    %v266 = vunpack.c.l.b16 %v254
    %v267 = vpack.c.b16 %v264, %v263
    %v268 = vpack.c.b16 %v266, %v265
    %v272 = vsel %vm165, %v258, 0
    %274 = vmatprep.subr.bf16.mxu0 0
    %275 = vmatpush1.bf16.msra.mxu0 %v267
    %276 = vmatprep.subr.bf16.mxu0 0
    %277 = vmatpush1.bf16.msra.mxu0 %v268
    %278 = vmatprep.subr.bf16.mxu0 0
    %279 = vmatpush1.bf16.msra.mxu0 0
    %280 = vmatprep.subr.bf16.mxu0 0
    %281 = vmatpush1.bf16.msra.mxu0 0
    %282 = vmatprep.subr.bf16.mxu0 0
    %283 = vmatpush1.bf16.msra.mxu0 0
    %284 = vmatprep.subr.bf16.mxu0 0
    %285 = vmatpush1.bf16.msra.mxu0 0
    %286 = vmatprep.subr.bf16.mxu0 0
    %287 = vmatpush1.bf16.msra.mxu0 0
    %288 = vmatprep.subr.bf16.mxu0 0
    %289 = vmatpush1.bf16.msra.mxu0 0
    %290 = vmatprep.subr.bf16.mxu0 0
    %291 = vmatpush1.bf16.msra.mxu0 0
    %292 = vmatprep.subr.bf16.mxu0 0
    %293 = vmatpush1.bf16.msra.mxu0 0
    %294 = vmatprep.subr.bf16.mxu0 0
    %295 = vmatpush1.bf16.msra.mxu0 0
    %296 = vmatprep.subr.bf16.mxu0 0
    %297 = vmatpush1.bf16.msra.mxu0 0
    %298 = vmatprep.subr.bf16.mxu0 0
    %299 = vmatpush1.bf16.msra.mxu0 0
    %300 = vmatprep.subr.bf16.mxu0 0
    %301 = vmatpush1.bf16.msra.mxu0 0
    %302 = vmatprep.subr.bf16.mxu0 0
    %303 = vmatpush1.bf16.msra.mxu0 0
    %304 = vmatprep.subr.bf16.mxu0 0
    %305 = vmatpush1.bf16.msra.mxu0 0
    %306 = vmatprep.mubr.bf16.mxu0 0
    %307 = vmatmul.mubr.bf16.gmra.mrb[0].mxu0 %v272
    %v308 = vpop.f32.mrb[0].mxu0
    %v309 = vadd.f32 0.0, %v308
    %v310 = vpop.f32.mrb[0].mxu0
    %v311 = vpop.f32.mrb[0].mxu0
    %v312 = vpop.f32.mrb[0].mxu0
    %313 = vdwg.mxu0
    %v314 = vadd.f32 %v257, %v309
    %v315 = vmul.f32 %v314, 0.5
    %v316 = vtanh.pop %v315
    %v317 = vmul.f32 %v316, 0.5
    %v318 = vadd.f32 %v317, 0.5
    %v319 = vtanh.pop %v314
    %321 = vrot.lane.b32.xlu0 %v256, 32
    %v322 = vpop.permute.xlu0 %321
    %v324 = vmul.f32 %v318, %v322
    %326 = vrot.lane.b32.xlu0 %v319, 64
    %v327 = vpop.permute.xlu0 %326
    %v329 = vmul.f32 %v318, %v327
    %331 = vrot.lane.b32.xlu0 %v329, 32
    %v332 = vpop.permute.xlu0 %331
    %v334 = vadd.f32 %v324, %v332
    %v335 = vtanh.pop %v334
    %337 = vrot.lane.b32.xlu0 %v335, 64
    %v338 = vpop.permute.xlu0 %337
    %v340 = vmul.f32 %v318, %v338
    %v341 = vpack.c.bf16 %v340, %v340
    %v343 = vunpack.c.l.b16 %v341
    %v344 = vpack.c.b16 %v343, %v343
    %345 = vrot.lane.b32.xlu0 %v344, 32
    %v346 = vpop.permute.xlu0 %345
    %vm348 = vcmask 257024
    %349 = vst.msk [vmem:[#allocation14] sm:$0xf] %vm348, %v346
    %s350 = scalar_lea.vmem [#allocation2], 8
    %v351 = vld [vmem:[%s350] sm:$0xff]
    %352 = vrot.lane.b32.xlu0 %v341, 32
    %v353 = vpop.permute.xlu0 %352
    %v355 = vsel %vm165, %v353, 0
    %357 = vmatprep.subr.bf16.mxu0 0
    %358 = vmatpush1.bf16.msra.mxu0 %v267
    %359 = vmatprep.subr.bf16.mxu0 0
    %360 = vmatpush1.bf16.msra.mxu0 %v268
    %361 = vmatprep.subr.bf16.mxu0 0
    %362 = vmatpush1.bf16.msra.mxu0 0
    %363 = vmatprep.subr.bf16.mxu0 0
    %364 = vmatpush1.bf16.msra.mxu0 0
    %365 = vmatprep.subr.bf16.mxu0 0
    %366 = vmatpush1.bf16.msra.mxu0 0
    %367 = vmatprep.subr.bf16.mxu0 0
    %368 = vmatpush1.bf16.msra.mxu0 0
    %369 = vmatprep.subr.bf16.mxu0 0
    %370 = vmatpush1.bf16.msra.mxu0 0
    %371 = vmatprep.subr.bf16.mxu0 0
    %372 = vmatpush1.bf16.msra.mxu0 0
    %373 = vmatprep.subr.bf16.mxu0 0
    %374 = vmatpush1.bf16.msra.mxu0 0
    %375 = vmatprep.subr.bf16.mxu0 0
    %376 = vmatpush1.bf16.msra.mxu0 0
    %377 = vmatprep.subr.bf16.mxu0 0
    %378 = vmatpush1.bf16.msra.mxu0 0
    %379 = vmatprep.subr.bf16.mxu0 0
    %380 = vmatpush1.bf16.msra.mxu0 0
    %381 = vmatprep.subr.bf16.mxu0 0
    %382 = vmatpush1.bf16.msra.mxu0 0
    %383 = vmatprep.subr.bf16.mxu0 0
    %384 = vmatpush1.bf16.msra.mxu0 0
    %385 = vmatprep.subr.bf16.mxu0 0
    %386 = vmatpush1.bf16.msra.mxu0 0
    %387 = vmatprep.subr.bf16.mxu0 0
    %388 = vmatpush1.bf16.msra.mxu0 0
    %389 = vmatprep.mubr.bf16.mxu0 0
    %390 = vmatmul.mubr.bf16.gmra.mrb[0].mxu0 %v355
    %v391 = vpop.f32.mrb[0].mxu0
    %v392 = vadd.f32 0.0, %v391
    %v393 = vpop.f32.mrb[0].mxu0
    %v394 = vpop.f32.mrb[0].mxu0
    %v395 = vpop.f32.mrb[0].mxu0
    %396 = vdwg.mxu0
    %v397 = vadd.f32 %v351, %v392
    %v398 = vmul.f32 %v397, 0.5
    %v399 = vtanh.pop %v398
    %v400 = vmul.f32 %v399, 0.5
    %v401 = vadd.f32 %v400, 0.5
    %v402 = vtanh.pop %v397
    %v403 = vmul.f32 %v401, %v334
    %405 = vrot.lane.b32.xlu0 %v402, 64
    %v406 = vpop.permute.xlu0 %405
    %v408 = vmul.f32 %v401, %v406
    %410 = vrot.lane.b32.xlu0 %v408, 32
    %v411 = vpop.permute.xlu0 %410
    %v413 = vadd.f32 %v403, %v411
    %v414 = vtanh.pop %v413
    %416 = vrot.lane.b32.xlu0 %v414, 64
    %v417 = vpop.permute.xlu0 %416
    %v419 = vmul.f32 %v401, %v417
    %v420 = vpack.c.bf16 %v419, %v419
    %v422 = vunpack.c.l.b16 %v420
    %v423 = vpack.c.b16 %v422, %v422
    %424 = vrot.lane.b32.xlu0 %v423, 32
    %v425 = vpop.permute.xlu0 %424
    %s427 = scalar_lea.vmem [#allocation14], 4
    %428 = vst.msk [vmem:[%s427] sm:$0xf] %vm348, %v425
    %s429 = scalar_lea.vmem [#allocation2], 16
    %v430 = vld [vmem:[%s429] sm:$0xff]
    %431 = vrot.lane.b32.xlu0 %v420, 32
    %v432 = vpop.permute.xlu0 %431
    %v434 = vsel %vm165, %v432, 0
    %436 = vmatprep.subr.bf16.mxu0 0
    %437 = vmatpush1.bf16.msra.mxu0 %v267
    %438 = vmatprep.subr.bf16.mxu0 0
    %439 = vmatpush1.bf16.msra.mxu0 %v268
    %440 = vmatprep.subr.bf16.mxu0 0
    %441 = vmatpush1.bf16.msra.mxu0 0
    %442 = vmatprep.subr.bf16.mxu0 0
    %443 = vmatpush1.bf16.msra.mxu0 0
    %444 = vmatprep.subr.bf16.mxu0 0
    %445 = vmatpush1.bf16.msra.mxu0 0
    %446 = vmatprep.subr.bf16.mxu0 0
    %447 = vmatpush1.bf16.msra.mxu0 0
    %448 = vmatprep.subr.bf16.mxu0 0
    %449 = vmatpush1.bf16.msra.mxu0 0
    %450 = vmatprep.subr.bf16.mxu0 0
    %451 = vmatpush1.bf16.msra.mxu0 0
    %452 = vmatprep.subr.bf16.mxu0 0
    %453 = vmatpush1.bf16.msra.mxu0 0
    %454 = vmatprep.subr.bf16.mxu0 0
    %455 = vmatpush1.bf16.msra.mxu0 0
    %456 = vmatprep.subr.bf16.mxu0 0
    %457 = vmatpush1.bf16.msra.mxu0 0
    %458 = vmatprep.subr.bf16.mxu0 0
    %459 = vmatpush1.bf16.msra.mxu0 0
    %460 = vmatprep.subr.bf16.mxu0 0
    %461 = vmatpush1.bf16.msra.mxu0 0
    %462 = vmatprep.subr.bf16.mxu0 0
    %463 = vmatpush1.bf16.msra.mxu0 0
    %464 = vmatprep.subr.bf16.mxu0 0
    %465 = vmatpush1.bf16.msra.mxu0 0
    %466 = vmatprep.subr.bf16.mxu0 0
    %467 = vmatpush1.bf16.msra.mxu0 0
    %468 = vmatprep.mubr.bf16.mxu0 0
    %469 = vmatmul.mubr.bf16.gmra.mrb[0].mxu0 %v434
    %v470 = vpop.f32.mrb[0].mxu0
    %v471 = vadd.f32 0.0, %v470
    %v472 = vpop.f32.mrb[0].mxu0
    %v473 = vpop.f32.mrb[0].mxu0
    %v474 = vpop.f32.mrb[0].mxu0
    %475 = vdwg.mxu0
    %v476 = vadd.f32 %v430, %v471
    %v477 = vmul.f32 %v476, 0.5
    %v478 = vtanh.pop %v477
    %v479 = vmul.f32 %v478, 0.5
    %v480 = vadd.f32 %v479, 0.5
    %v481 = vtanh.pop %v476
    %v482 = vmul.f32 %v480, %v413
    %484 = vrot.lane.b32.xlu0 %v481, 64
    %v485 = vpop.permute.xlu0 %484
    %v487 = vmul.f32 %v480, %v485
    %489 = vrot.lane.b32.xlu0 %v487, 32
    %v490 = vpop.permute.xlu0 %489
    %v492 = vadd.f32 %v482, %v490
    %v493 = vtanh.pop %v492
    %495 = vrot.lane.b32.xlu0 %v493, 64
    %v496 = vpop.permute.xlu0 %495
    %v498 = vmul.f32 %v480, %v496
    %v499 = vpack.c.bf16 %v498, %v498
    %v501 = vunpack.c.l.b16 %v499
    %v502 = vpack.c.b16 %v501, %v501
    %503 = vrot.lane.b32.xlu0 %v502, 32
    %v504 = vpop.permute.xlu0 %503
    %s506 = scalar_lea.vmem [#allocation14], 8
    %507 = vst.msk [vmem:[%s506] sm:$0xf] %vm348, %v504
    %s508 = scalar_lea.vmem [#allocation2], 24
    %v509 = vld [vmem:[%s508] sm:$0xff]
    %510 = vrot.lane.b32.xlu0 %v499, 32
    %v511 = vpop.permute.xlu0 %510
    %v513 = vsel %vm165, %v511, 0
    %515 = vmatprep.subr.bf16.mxu0 0
    %516 = vmatpush1.bf16.msra.mxu0 %v267
    %517 = vmatprep.subr.bf16.mxu0 0
    %518 = vmatpush1.bf16.msra.mxu0 %v268
    %519 = vmatprep.subr.bf16.mxu0 0
    %520 = vmatpush1.bf16.msra.mxu0 0
    %521 = vmatprep.subr.bf16.mxu0 0
    %522 = vmatpush1.bf16.msra.mxu0 0
    %523 = vmatprep.subr.bf16.mxu0 0
    %524 = vmatpush1.bf16.msra.mxu0 0
    %525 = vmatprep.subr.bf16.mxu0 0
    %526 = vmatpush1.bf16.msra.mxu0 0
    %527 = vmatprep.subr.bf16.mxu0 0
    %528 = vmatpush1.bf16.msra.mxu0 0
    %529 = vmatprep.subr.bf16.mxu0 0
    %530 = vmatpush1.bf16.msra.mxu0 0
    %531 = vmatprep.subr.bf16.mxu0 0
    %532 = vmatpush1.bf16.msra.mxu0 0
    %533 = vmatprep.subr.bf16.mxu0 0
    %534 = vmatpush1.bf16.msra.mxu0 0
    %535 = vmatprep.subr.bf16.mxu0 0
    %536 = vmatpush1.bf16.msra.mxu0 0
    %537 = vmatprep.subr.bf16.mxu0 0
    %538 = vmatpush1.bf16.msra.mxu0 0
    %539 = vmatprep.subr.bf16.mxu0 0
    %540 = vmatpush1.bf16.msra.mxu0 0
    %541 = vmatprep.subr.bf16.mxu0 0
    %542 = vmatpush1.bf16.msra.mxu0 0
    %543 = vmatprep.subr.bf16.mxu0 0
    %544 = vmatpush1.bf16.msra.mxu0 0
    %545 = vmatprep.subr.bf16.mxu0 0
    %546 = vmatpush1.bf16.msra.mxu0 0
    %547 = vmatprep.mubr.bf16.mxu0 0
    %548 = vmatmul.mubr.bf16.gmra.mrb[0].mxu0 %v513
    %v549 = vpop.f32.mrb[0].mxu0
    %v550 = vadd.f32 0.0, %v549
    %v551 = vpop.f32.mrb[0].mxu0
    %v552 = vpop.f32.mrb[0].mxu0
    %v553 = vpop.f32.mrb[0].mxu0
    %554 = vdwg.mxu0
    %v555 = vadd.f32 %v509, %v550
    %v556 = vmul.f32 %v555, 0.5
    %v557 = vtanh.pop %v556
    %v558 = vmul.f32 %v557, 0.5
    %v559 = vadd.f32 %v558, 0.5
    %v560 = vtanh.pop %v555
    %v561 = vmul.f32 %v559, %v492
    %563 = vrot.lane.b32.xlu0 %v560, 64
    %v564 = vpop.permute.xlu0 %563
    %v566 = vmul.f32 %v559, %v564
    %568 = vrot.lane.b32.xlu0 %v566, 32
    %v569 = vpop.permute.xlu0 %568
    %v571 = vadd.f32 %v561, %v569
    %v572 = vtanh.pop %v571
    %574 = vrot.lane.b32.xlu0 %v572, 64
    %v575 = vpop.permute.xlu0 %574
    %v577 = vmul.f32 %v559, %v575
    %v578 = vpack.c.bf16 %v577, %v577
    %v580 = vunpack.c.l.b16 %v578
    %v581 = vpack.c.b16 %v580, %v580
    %582 = vrot.lane.b32.xlu0 %v581, 32
    %v583 = vpop.permute.xlu0 %582
    %s585 = scalar_lea.vmem [#allocation14], 12
    %586 = vst.msk [vmem:[%s585] sm:$0xf] %vm348, %v583
    %s587 = scalar_lea.vmem [#allocation2], 32
    %v588 = vld [vmem:[%s587] sm:$0xff]
    %589 = vrot.lane.b32.xlu0 %v578, 32
    %v590 = vpop.permute.xlu0 %589
    %v592 = vsel %vm165, %v590, 0
    %594 = vmatprep.subr.bf16.mxu0 0
    %595 = vmatpush1.bf16.msra.mxu0 %v267
    %596 = vmatprep.subr.bf16.mxu0 0
    %597 = vmatpush1.bf16.msra.mxu0 %v268
    %598 = vmatprep.subr.bf16.mxu0 0
    %599 = vmatpush1.bf16.msra.mxu0 0
    %600 = vmatprep.subr.bf16.mxu0 0
    %601 = vmatpush1.bf16.msra.mxu0 0
    %602 = vmatprep.subr.bf16.mxu0 0
    %603 = vmatpush1.bf16.msra.mxu0 0
    %604 = vmatprep.subr.bf16.mxu0 0
    %605 = vmatpush1.bf16.msra.mxu0 0
    %606 = vmatprep.subr.bf16.mxu0 0
    %607 = vmatpush1.bf16.msra.mxu0 0
    %608 = vmatprep.subr.bf16.mxu0 0
    %609 = vmatpush1.bf16.msra.mxu0 0
    %610 = vmatprep.subr.bf16.mxu0 0
    %611 = vmatpush1.bf16.msra.mxu0 0
    %612 = vmatprep.subr.bf16.mxu0 0
    %613 = vmatpush1.bf16.msra.mxu0 0
    %614 = vmatprep.subr.bf16.mxu0 0
    %615 = vmatpush1.bf16.msra.mxu0 0
    %616 = vmatprep.subr.bf16.mxu0 0
    %617 = vmatpush1.bf16.msra.mxu0 0
    %618 = vmatprep.subr.bf16.mxu0 0
    %619 = vmatpush1.bf16.msra.mxu0 0
    %620 = vmatprep.subr.bf16.mxu0 0
    %621 = vmatpush1.bf16.msra.mxu0 0
    %622 = vmatprep.subr.bf16.mxu0 0
    %623 = vmatpush1.bf16.msra.mxu0 0
    %624 = vmatprep.subr.bf16.mxu0 0
    %625 = vmatpush1.bf16.msra.mxu0 0
    %626 = vmatprep.mubr.bf16.mxu0 0
    %627 = vmatmul.mubr.bf16.gmra.mrb[0].mxu0 %v592
    %v628 = vpop.f32.mrb[0].mxu0
    %v629 = vadd.f32 0.0, %v628
    %v630 = vpop.f32.mrb[0].mxu0
    %v631 = vpop.f32.mrb[0].mxu0
    %v632 = vpop.f32.mrb[0].mxu0
    %633 = vdwg.mxu0
    %v634 = vadd.f32 %v588, %v629
    %v635 = vmul.f32 %v634, 0.5
    %v636 = vtanh.pop %v635
    %v637 = vmul.f32 %v636, 0.5
    %v638 = vadd.f32 %v637, 0.5
    %v639 = vtanh.pop %v634
    %v640 = vmul.f32 %v638, %v571
    %642 = vrot.lane.b32.xlu0 %v639, 64
    %v643 = vpop.permute.xlu0 %642
    %v645 = vmul.f32 %v638, %v643
    %647 = vrot.lane.b32.xlu0 %v645, 32
    %v648 = vpop.permute.xlu0 %647
    %v650 = vadd.f32 %v640, %v648
    %v651 = vtanh.pop %v650
    %653 = vrot.lane.b32.xlu0 %v651, 64
    %v654 = vpop.permute.xlu0 %653
    %v656 = vmul.f32 %v638, %v654
    %v657 = vpack.c.bf16 %v656, %v656
    %v659 = vunpack.c.l.b16 %v657
    %v660 = vpack.c.b16 %v659, %v659
    %661 = vrot.lane.b32.xlu0 %v660, 32
    %v662 = vpop.permute.xlu0 %661
    %s664 = scalar_lea.vmem [#allocation14], 16
    %665 = vst.msk [vmem:[%s664] sm:$0xf] %vm348, %v662
    %s666 = scalar_lea.vmem [#allocation2], 40
    %v667 = vld [vmem:[%s666] sm:$0xff]
    %668 = vrot.lane.b32.xlu0 %v657, 32
    %v669 = vpop.permute.xlu0 %668
    %v671 = vsel %vm165, %v669, 0
    %673 = vmatprep.subr.bf16.mxu0 0
    %674 = vmatpush1.bf16.msra.mxu0 %v267
    %675 = vmatprep.subr.bf16.mxu0 0
    %676 = vmatpush1.bf16.msra.mxu0 %v268
    %677 = vmatprep.subr.bf16.mxu0 0
    %678 = vmatpush1.bf16.msra.mxu0 0
    %679 = vmatprep.subr.bf16.mxu0 0
    %680 = vmatpush1.bf16.msra.mxu0 0
    %681 = vmatprep.subr.bf16.mxu0 0
    %682 = vmatpush1.bf16.msra.mxu0 0
    %683 = vmatprep.subr.bf16.mxu0 0
    %684 = vmatpush1.bf16.msra.mxu0 0
    %685 = vmatprep.subr.bf16.mxu0 0
    %686 = vmatpush1.bf16.msra.mxu0 0
    %687 = vmatprep.subr.bf16.mxu0 0
    %688 = vmatpush1.bf16.msra.mxu0 0
    %689 = vmatprep.subr.bf16.mxu0 0
    %690 = vmatpush1.bf16.msra.mxu0 0
    %691 = vmatprep.subr.bf16.mxu0 0
    %692 = vmatpush1.bf16.msra.mxu0 0
    %693 = vmatprep.subr.bf16.mxu0 0
    %694 = vmatpush1.bf16.msra.mxu0 0
    %695 = vmatprep.subr.bf16.mxu0 0
    %696 = vmatpush1.bf16.msra.mxu0 0
    %697 = vmatprep.subr.bf16.mxu0 0
    %698 = vmatpush1.bf16.msra.mxu0 0
    %699 = vmatprep.subr.bf16.mxu0 0
    %700 = vmatpush1.bf16.msra.mxu0 0
    %701 = vmatprep.subr.bf16.mxu0 0
    %702 = vmatpush1.bf16.msra.mxu0 0
    %703 = vmatprep.subr.bf16.mxu0 0
    %704 = vmatpush1.bf16.msra.mxu0 0
    %705 = vmatprep.mubr.bf16.mxu0 0
    %706 = vmatmul.mubr.bf16.gmra.mrb[0].mxu0 %v671
    %v707 = vpop.f32.mrb[0].mxu0
    %v708 = vadd.f32 0.0, %v707
    %v709 = vpop.f32.mrb[0].mxu0
    %v710 = vpop.f32.mrb[0].mxu0
    %v711 = vpop.f32.mrb[0].mxu0
    %712 = vdwg.mxu0
    %v713 = vadd.f32 %v667, %v708
    %v714 = vmul.f32 %v713, 0.5
    %v715 = vtanh.pop %v714
    %v716 = vmul.f32 %v715, 0.5
    %v717 = vadd.f32 %v716, 0.5
    %v718 = vtanh.pop %v713
    %v719 = vmul.f32 %v717, %v650
    %721 = vrot.lane.b32.xlu0 %v718, 64
    %v722 = vpop.permute.xlu0 %721
    %v724 = vmul.f32 %v717, %v722
    %726 = vrot.lane.b32.xlu0 %v724, 32
    %v727 = vpop.permute.xlu0 %726
    %v729 = vadd.f32 %v719, %v727
    %v730 = vtanh.pop %v729
    %732 = vrot.lane.b32.xlu0 %v730, 64
    %v733 = vpop.permute.xlu0 %732
    %v735 = vmul.f32 %v717, %v733
    %v736 = vpack.c.bf16 %v735, %v735
    %v738 = vunpack.c.l.b16 %v736
    %v739 = vpack.c.b16 %v738, %v738
    %740 = vrot.lane.b32.xlu0 %v739, 32
    %v741 = vpop.permute.xlu0 %740
    %s743 = scalar_lea.vmem [#allocation14], 20
    %744 = vst.msk [vmem:[%s743] sm:$0xf] %vm348, %v741
    %s745 = scalar_lea.vmem [#allocation2], 48
    %v746 = vld [vmem:[%s745] sm:$0xff]
    %747 = vrot.lane.b32.xlu0 %v736, 32
    %v748 = vpop.permute.xlu0 %747
    %v750 = vsel %vm165, %v748, 0
    %752 = vmatprep.subr.bf16.mxu0 0
    %753 = vmatpush1.bf16.msra.mxu0 %v267
    %754 = vmatprep.subr.bf16.mxu0 0
    %755 = vmatpush1.bf16.msra.mxu0 %v268
    %756 = vmatprep.subr.bf16.mxu0 0
    %757 = vmatpush1.bf16.msra.mxu0 0
    %758 = vmatprep.subr.bf16.mxu0 0
    %759 = vmatpush1.bf16.msra.mxu0 0
    %760 = vmatprep.subr.bf16.mxu0 0
    %761 = vmatpush1.bf16.msra.mxu0 0
    %762 = vmatprep.subr.bf16.mxu0 0
    %763 = vmatpush1.bf16.msra.mxu0 0
    %764 = vmatprep.subr.bf16.mxu0 0
    %765 = vmatpush1.bf16.msra.mxu0 0
    %766 = vmatprep.subr.bf16.mxu0 0
    %767 = vmatpush1.bf16.msra.mxu0 0
    %768 = vmatprep.subr.bf16.mxu0 0
    %769 = vmatpush1.bf16.msra.mxu0 0
    %770 = vmatprep.subr.bf16.mxu0 0
    %771 = vmatpush1.bf16.msra.mxu0 0
    %772 = vmatprep.subr.bf16.mxu0 0
    %773 = vmatpush1.bf16.msra.mxu0 0
    %774 = vmatprep.subr.bf16.mxu0 0
    %775 = vmatpush1.bf16.msra.mxu0 0
    %776 = vmatprep.subr.bf16.mxu0 0
    %777 = vmatpush1.bf16.msra.mxu0 0
    %778 = vmatprep.subr.bf16.mxu0 0
    %779 = vmatpush1.bf16.msra.mxu0 0
    %780 = vmatprep.subr.bf16.mxu0 0
    %781 = vmatpush1.bf16.msra.mxu0 0
    %782 = vmatprep.subr.bf16.mxu0 0
    %783 = vmatpush1.bf16.msra.mxu0 0
    %784 = vmatprep.mubr.bf16.mxu0 0
    %785 = vmatmul.mubr.bf16.gmra.mrb[0].mxu0 %v750
    %v786 = vpop.f32.mrb[0].mxu0
    %v787 = vadd.f32 0.0, %v786
    %v788 = vpop.f32.mrb[0].mxu0
    %v789 = vpop.f32.mrb[0].mxu0
    %v790 = vpop.f32.mrb[0].mxu0
    %791 = vdwg.mxu0
    %v792 = vadd.f32 %v746, %v787
    %v793 = vmul.f32 %v792, 0.5
    %v794 = vtanh.pop %v793
    %v795 = vmul.f32 %v794, 0.5
    %v796 = vadd.f32 %v795, 0.5
    %v797 = vtanh.pop %v792
    %v798 = vmul.f32 %v796, %v729
    %800 = vrot.lane.b32.xlu0 %v797, 64
    %v801 = vpop.permute.xlu0 %800
    %v803 = vmul.f32 %v796, %v801
    %805 = vrot.lane.b32.xlu0 %v803, 32
    %v806 = vpop.permute.xlu0 %805
    %v808 = vadd.f32 %v798, %v806
    %v809 = vtanh.pop %v808
    %811 = vrot.lane.b32.xlu0 %v809, 64
    %v812 = vpop.permute.xlu0 %811
    %v814 = vmul.f32 %v796, %v812
    %v815 = vpack.c.bf16 %v814, %v814
    %v817 = vunpack.c.l.b16 %v815
    %v818 = vpack.c.b16 %v817, %v817
    %819 = vrot.lane.b32.xlu0 %v818, 32
    %v820 = vpop.permute.xlu0 %819
    %s822 = scalar_lea.vmem [#allocation14], 24
    %823 = vst.msk [vmem:[%s822] sm:$0xf] %vm348, %v820
    %s824 = scalar_lea.vmem [#allocation2], 56
    %v825 = vld [vmem:[%s824] sm:$0xff]
    %826 = vrot.lane.b32.xlu0 %v815, 32
    %v827 = vpop.permute.xlu0 %826
    %v829 = vsel %vm165, %v827, 0
    %831 = vmatprep.subr.bf16.mxu0 0
    %832 = vmatpush1.bf16.msra.mxu0 %v267
    %833 = vmatprep.subr.bf16.mxu0 0
    %834 = vmatpush1.bf16.msra.mxu0 %v268
    %835 = vmatprep.subr.bf16.mxu0 0
    %836 = vmatpush1.bf16.msra.mxu0 0
    %837 = vmatprep.subr.bf16.mxu0 0
    %838 = vmatpush1.bf16.msra.mxu0 0
    %839 = vmatprep.subr.bf16.mxu0 0
    %840 = vmatpush1.bf16.msra.mxu0 0
    %841 = vmatprep.subr.bf16.mxu0 0
    %842 = vmatpush1.bf16.msra.mxu0 0
    %843 = vmatprep.subr.bf16.mxu0 0
    %844 = vmatpush1.bf16.msra.mxu0 0
    %845 = vmatprep.subr.bf16.mxu0 0
    %846 = vmatpush1.bf16.msra.mxu0 0
    %847 = vmatprep.subr.bf16.mxu0 0
    %848 = vmatpush1.bf16.msra.mxu0 0
    %849 = vmatprep.subr.bf16.mxu0 0
    %850 = vmatpush1.bf16.msra.mxu0 0
    %851 = vmatprep.subr.bf16.mxu0 0
    %852 = vmatpush1.bf16.msra.mxu0 0
    %853 = vmatprep.subr.bf16.mxu0 0
    %854 = vmatpush1.bf16.msra.mxu0 0
    %855 = vmatprep.subr.bf16.mxu0 0
    %856 = vmatpush1.bf16.msra.mxu0 0
    %857 = vmatprep.subr.bf16.mxu0 0
    %858 = vmatpush1.bf16.msra.mxu0 0
    %859 = vmatprep.subr.bf16.mxu0 0
    %860 = vmatpush1.bf16.msra.mxu0 0
    %861 = vmatprep.subr.bf16.mxu0 0
    %862 = vmatpush1.bf16.msra.mxu0 0
    %863 = vmatprep.mubr.bf16.mxu0 0
    %864 = vmatmul.mubr.bf16.gmra.mrb[0].mxu0 %v829
    %v865 = vpop.f32.mrb[0].mxu0
    %v866 = vadd.f32 0.0, %v865
    %v867 = vpop.f32.mrb[0].mxu0
    %v868 = vpop.f32.mrb[0].mxu0
    %v869 = vpop.f32.mrb[0].mxu0
    %870 = vdwg.mxu0
    %v871 = vadd.f32 %v825, %v866
    %v872 = vmul.f32 %v871, 0.5
    %v873 = vtanh.pop %v872
    %v874 = vmul.f32 %v873, 0.5
    %v875 = vadd.f32 %v874, 0.5
    %v876 = vtanh.pop %v871
    %v877 = vmul.f32 %v875, %v808
    %879 = vrot.lane.b32.xlu0 %v876, 64
    %v880 = vpop.permute.xlu0 %879
    %v882 = vmul.f32 %v875, %v880
    %884 = vrot.lane.b32.xlu0 %v882, 32
    %v885 = vpop.permute.xlu0 %884
    %v887 = vadd.f32 %v877, %v885
    %v888 = vtanh.pop %v887
    %890 = vrot.lane.b32.xlu0 %v888, 64
    %v891 = vpop.permute.xlu0 %890
    %v893 = vmul.f32 %v875, %v891
    %v894 = vpack.c.bf16 %v893, %v893
    %v896 = vunpack.c.l.b16 %v894
    %v897 = vpack.c.b16 %v896, %v896
    %898 = vrot.lane.b32.xlu0 %v897, 32
    %v899 = vpop.permute.xlu0 %898
    %s901 = scalar_lea.vmem [#allocation14], 28
    %902 = vst.msk [vmem:[%s901] sm:$0xf] %vm348, %v899
    %904 = vrot.lane.b32.xlu0 %v893, 32
    %v905 = vpop.permute.xlu0 %904
    %907 = vst.msk [vmem:[#allocation15] sm:$0xff] %vm165, %v905
    %909 = vrot.lane.b32.xlu0 %v887, 96
    %v910 = vpop.permute.xlu0 %909
    %912 = vst.msk [vmem:[#allocation17] sm:$0xff] %vm165, %v910
    // Predicated region
    $region54: #{lstm_forward.5} parent=1 // pred_check
      _
    $region55: #{lstm_forward.5} parent=1 // pred_check_branch
      %914 = sbr.rel (0) target = $region57
    $region56: #{lstm_forward.5} parent=1 // pred_region
      %s916 = ssub.s32 512, 512
      %917 = vsyncadd [#allocation5], %s916
      %s918 = sshll.u32 [#allocation14], 4
      %s919 = int_to_ptr.vmem [resolvable:$true] %s918
      %924 = dma.vmem_to_hbm [thread:$0]  %s919, 512, %s6, [#allocation5], 64, 64, 4
    $region57: #{lstm_forward.5} parent=1 // pred_fallthru
      _
    // Predicated region
    $region58: #{lstm_forward.5} parent=1 // pred_check
      _
    $region59: #{lstm_forward.5} parent=1 // pred_check_branch
      %926 = sbr.rel (0) target = $region61
    $region60: #{lstm_forward.5} parent=1 // pred_region
      %s928 = ssub.s32 128, 128
      %929 = vsyncadd [#allocation16], %s928
      %s931 = sshll.u32 [#allocation15], 4
      %s932 = int_to_ptr.vmem [resolvable:$true] %s931
      %934 = dma.vmem_to_hbm [thread:$0]  %s932, 128, %s7, [#allocation16]
    $region61: #{lstm_forward.5} parent=1 // pred_fallthru
      _
    // Predicated region
    $region62: #{lstm_forward.5} parent=1 // pred_check
      _
    $region63: #{lstm_forward.5} parent=1 // pred_check_branch
      %936 = sbr.rel (0) target = $region65
    $region64: #{lstm_forward.5} parent=1 // pred_region
      %s938 = ssub.s32 128, 128
      %939 = vsyncadd [#allocation16], %s938
      %s941 = sshll.u32 [#allocation17], 4
      %s942 = int_to_ptr.vmem [resolvable:$true] %s941
      %944 = dma.vmem_to_hbm [thread:$0]  %s942, 128, %s8, [#allocation16]
    $region65: #{lstm_forward.5} parent=1 // pred_fallthru
      _
    // Predicated region
    $region66: #{lstm_forward.5} parent=1 // pred_check
      _
    $region67: #{lstm_forward.5} parent=1 // pred_check_branch
      %946 = sbr.rel (0) target = $region69
    $region68: #{lstm_forward.5} parent=1 // pred_region
      %947 = dma.done [#allocation5], 512
    $region69: #{lstm_forward.5} parent=1 // pred_fallthru
      _
    // Predicated region
    $region70: #{lstm_forward.5} parent=1 // pred_check
      _
    $region71: #{lstm_forward.5} parent=1 // pred_check_branch
      %949 = sbr.rel (0) target = $region73
    $region72: #{lstm_forward.5} parent=1 // pred_region
      %950 = dma.done [#allocation16], 128
    $region73: #{lstm_forward.5} parent=1 // pred_fallthru
      _
    // Predicated region
    $region74: #{lstm_forward.5} parent=1 // pred_check
      _
    $region75: #{lstm_forward.5} parent=1 // pred_check_branch
      %952 = sbr.rel (0) target = $region77
    $region76: #{lstm_forward.5} parent=1 // pred_region
      %953 = dma.done [#allocation16], 128
    $region77: #{lstm_forward.5} parent=1 // pred_fallthru
      _
    %954 = vsyncpa [#allocation4], 1
    %955 = vsyncpa [#allocation7], 1
    %956 = vsyncpa [#allocation10], 1
    %957 = vsyncpa [#allocation13], 1
    %958 = vsyncpa [#allocation5], 1
    %959 = vsyncpa [#allocation16], 1

</llo_original>
